<compile_context>
chip_gen: v7x
topology: tpu7x:2x2x1
jax: 0.10.0
libtpu: 0.0.40
codegen_flags: <defaults>
</compile_context>

<pallas_src>
import functools

import jax
import jax.numpy as jnp
from jax.experimental import pallas as pl
from jax.experimental.pallas import tpu as pltpu

EPS = 1e-3        # LayerNormalization eps (matches the PyTorch module)
NEG_INF = -1e9    # finite mask value (avoids inf-inf -> NaN on fully-masked rows)


def _round_up(x, m):
    return (x + m - 1) // m * m


def _masked_layer_norm(z, a, b, fmask, d_valid):
    # Matches LayerNormalization.forward: torch.std is the *unbiased* estimator
    # (divides by D-1), eps is added to sigma (not variance).  Statistics are
    # computed over the first d_valid (true d_model) feature columns only.
    zm = z * fmask
    mu = jnp.sum(zm, axis=-1, keepdims=True) * (1.0 / d_valid)
    diff = (z - mu) * fmask
    var = jnp.sum(diff * diff, axis=-1, keepdims=True) * (1.0 / (d_valid - 1))
    inv = 1.0 / (jnp.sqrt(var) + EPS)     # exact reciprocal on the LN path
    # a/b are zero-padded beyond d_valid, so padded columns stay exactly 0.
    return (z - mu) * inv * a + b


# ---------------------------------------------------------------------------
# Fused encoder layer kernel: MultiHeadAttention + PositionwiseFeedForward.
# One grid step processes a tile of `bt` sequences.
# ---------------------------------------------------------------------------
def encoder_layer_kernel(x_ref, mask_ref,
                         wqkv_ref, wo_ref, attn_a_ref, attn_b_ref,
                         w1_ref, b1_ref, w2_ref, b2_ref, ff_a_ref, ff_b_ref,
                         o_ref, ctx_ref,
                         *, n_head, d_model, d_kp, d_vp, bt, l_pad):
    d_pad = x_ref.shape[-1]
    m_rows = bt * l_pad

    x_bf = x_ref[...].reshape(m_rows, d_pad)     # (M, Dp)  bf16 activations
    mask_k = mask_ref[...]                       # (Bt, 1, Lp)  1.0 = valid key

    # feature-validity mask for LayerNorm over the true d_model columns
    fmask = (jax.lax.broadcasted_iota(jnp.int32, (1, d_pad), 1)
             < d_model).astype(jnp.float32)

    # ---- fused QKV projection: one MXU matmul for all heads & Q/K/V -------
    # column layout of wqkv: [Q(h0..hH-1) | K(h0..hH-1) | V(h0..hH-1)], each
    # per-head block padded to d_kp / d_vp (multiples of 128 lanes).
    # 1/temper (= 1/sqrt(d_model), as in ScaledDotProductAttention) is folded
    # into the packed W_q columns in prepare_encoder_params.
    qkv = jnp.dot(x_bf, wqkv_ref[...], preferred_element_type=jnp.float32)
    qkv_bf = qkv.astype(jnp.bfloat16)            # cast once; slices stay bf16

    # mask bias hoisted out of the head loop (invalid key columns -> -1e9)
    neg_bias = (1.0 - mask_k) * NEG_INF          # (Bt, 1, Lp)

    k_off = n_head * d_kp
    v_off = 2 * n_head * d_kp
    for h in range(n_head):          # short static loop; all slices 128-aligned
        qh = qkv_bf[:, h * d_kp:(h + 1) * d_kp].reshape(bt, l_pad, d_kp)
        kh = qkv_bf[:, k_off + h * d_kp:k_off + (h + 1) * d_kp].reshape(bt, l_pad, d_kp)
        vh = qkv_bf[:, v_off + h * d_vp:v_off + (h + 1) * d_vp].reshape(bt, l_pad, d_vp)

        s = jnp.einsum('blk,bmk->blm', qh, kh,
                       preferred_element_type=jnp.float32)       # (Bt, Lp, Lp)
        s = s + neg_bias
        s = s - jnp.max(s, axis=-1, keepdims=True)
        e = jnp.exp(s)
        p = e * pl.reciprocal(jnp.sum(e, axis=-1, keepdims=True), approx=True)

        ctx = jnp.einsum('blm,bmv->blv', p.astype(jnp.bfloat16), vh,
                         preferred_element_type=jnp.float32)      # (Bt, Lp, dvp)
        # write this head's context into the lane-aligned VMEM slab
        ctx_ref[:, h * d_vp:(h + 1) * d_vp] = (
            ctx.reshape(m_rows, d_vp).astype(jnp.bfloat16))

    # ---- single output projection over all heads (combine_v) --------------
    proj = jnp.dot(ctx_ref[...], wo_ref[...], preferred_element_type=jnp.float32)

    x_f32 = x_bf.astype(jnp.float32)
    attn_out = _masked_layer_norm(proj + x_f32, attn_a_ref[...], attn_b_ref[...],
                                  fmask, d_model)                 # (M, Dp)

    # ---- position-wise feed-forward (fused, no HBM round-trip) ------------
    h1 = jnp.dot(attn_out.astype(jnp.bfloat16), w1_ref[...],
                 preferred_element_type=jnp.float32) + b1_ref[...]
    h1 = jnp.maximum(h1, 0.0)                    # ReLU
    y = jnp.dot(h1.astype(jnp.bfloat16), w2_ref[...],
                preferred_element_type=jnp.float32) + b2_ref[...]
    ff_out = _masked_layer_norm(y + attn_out, ff_a_ref[...], ff_b_ref[...],
                                fmask, d_model)

    # Padded rows/columns never contaminate valid outputs (keys are masked,
    # padded feature columns stay 0 through the zero-padded weights), so no
    # row-zeroing store pass is needed.  Store is lane-dense bf16.
    o_ref[...] = ff_out.reshape(bt, l_pad, d_pad).astype(o_ref.dtype)


# ---------------------------------------------------------------------------
# Generation-aware tiling plan.
# ---------------------------------------------------------------------------
def _plan_tiling(B, l_pad, cfg):
    d_pad, d_kp, d_vp = cfg["d_pad"], cfg["d_kp"], cfg["d_vp"]
    d_ff_pad, n_head = cfg["d_ff_pad"], cfg["n_head"]
    try:
        vmem_cap = int(pltpu.get_tpu_info().vmem_capacity_bytes)
    except Exception:
        vmem_cap = 64 << 20          # conservative default (v7x per-TC VMEM)

    qkv_w = n_head * (2 * d_kp + d_vp)
    # Resident weights (BlockSpec double-buffers even constant blocks).
    weights_bytes = 2 * (2 * d_pad * qkv_w
                         + 2 * n_head * d_vp * d_pad
                         + 2 * d_pad * d_ff_pad
                         + 2 * d_ff_pad * d_pad
                         + 4 * (5 * d_pad + d_ff_pad))
    # In-kernel footprint per sequence in the tile.
    per_seq = (
        2 * 2 * l_pad * d_pad * 2            # in/out activation tiles (bf16, 2-buf)
        + l_pad * qkv_w * 6                  # qkv f32 + bf16 copy
        + n_head * l_pad * l_pad * 8         # per-head scores + probs (f32)
        + n_head * l_pad * d_vp * 6          # per-head ctx f32 + bf16 slab
        + 5 * l_pad * d_pad * 4              # proj / attn_out / y / ff_out / x_f32
        + l_pad * d_ff_pad * 6               # h1 f32 + bf16
    )
    budget = max(vmem_cap // 3 - weights_bytes, per_seq)
    bt = max(1, min(B, budget // per_seq))
    if B >= 2:
        # Keep at least 2 grid steps so the "parallel" batch axis can be
        # sharded across both v7x TensorCores and the pipeline stays busy.
        bt = min(bt, (B + 1) // 2)
    b_pad = _round_up(B, bt)
    vmem_limit = int(min(vmem_cap,
                         max(32 << 20, 2 * (weights_bytes + bt * per_seq))))
    return bt, b_pad, vmem_limit


# ---------------------------------------------------------------------------
# pallas_call wrapper for one layer.
# ---------------------------------------------------------------------------
def _fused_layer_call(x, mask_k, p, cfg, bt, vmem_limit):
    b_pad, l_pad, d_pad = x.shape
    n_head, d_vp = cfg["n_head"], cfg["d_vp"]
    kernel = functools.partial(encoder_layer_kernel, n_head=n_head,
                               d_model=cfg["d_model"], d_kp=cfg["d_kp"],
                               d_vp=d_vp, bt=bt, l_pad=l_pad)

    def wspec(arr):
        # Constant weight block, fetched once.  (Could be single-buffered with
        # pipeline_mode=pl.Buffered(1); kept default for portability.)
        return pl.BlockSpec(arr.shape, lambda i: (0,) * arr.ndim)

    return pl.pallas_call(
        kernel,
        out_shape=jax.ShapeDtypeStruct((b_pad, l_pad, d_pad), jnp.bfloat16),
        grid_spec=pltpu.PrefetchScalarGridSpec(
            num_scalar_prefetch=0,
            grid=(b_pad // bt,),
            in_specs=[
                pl.BlockSpec((bt, l_pad, d_pad), lambda i: (i, 0, 0)),
                pl.BlockSpec((bt, 1, l_pad), lambda i: (i, 0, 0)),
                wspec(p["wqkv"]), wspec(p["wo"]),
                wspec(p["attn_ln_a"]), wspec(p["attn_ln_b"]),
                wspec(p["w1"]), wspec(p["b1"]),
                wspec(p["w2"]), wspec(p["b2"]),
                wspec(p["ff_ln_a"]), wspec(p["ff_ln_b"]),
            ],
            out_specs=pl.BlockSpec((bt, l_pad, d_pad), lambda i: (i, 0, 0)),
            scratch_shapes=[pltpu.VMEM((bt * l_pad, n_head * d_vp), jnp.bfloat16)],
        ),
        compiler_params=pltpu.CompilerParams(
            dimension_semantics=("parallel",),
            vmem_limit_bytes=vmem_limit),
    )(x, mask_k, p["wqkv"], p["wo"], p["attn_ln_a"], p["attn_ln_b"],
      p["w1"], p["b1"], p["w2"], p["b2"], p["ff_ln_a"], p["ff_ln_b"])


# ---------------------------------------------------------------------------
# One-time weight packing (hoisted out of the forward pass).
# ---------------------------------------------------------------------------
def prepare_encoder_params(layer_params, d_model):
    d_pad = _round_up(max(d_model, 128), 128)
    packed, cfg = [], None
    for p in layer_params:
        H, D, d_k = p["wq"].shape
        d_v = p["wv"].shape[-1]
        d_ff = p["w1"].shape[-1]
        d_kp = _round_up(d_k, 128)           # lane-aligned per-head Q/K width
        d_vp = _round_up(d_v, 128)           # lane-aligned per-head V width
        d_ff_pad = _round_up(d_ff, 128)
        temper = d_model ** 0.5              # ScaledDotProductAttention temper
        pad_d = d_pad - D

        def pad_head(w, dp):
            # (H, D, d_h) -> (d_pad, H*dp): per-head blocks start at multiples
            # of 128 lanes; padding rows/cols are zero so results are exact.
            w = jnp.pad(w, ((0, 0), (0, pad_d), (0, dp - w.shape[-1])))
            return jnp.transpose(w, (1, 0, 2)).reshape(d_pad, H * dp)

        wqkv = jnp.concatenate(
            [pad_head(p["wq"] / temper, d_kp),
             pad_head(p["wk"], d_kp),
             pad_head(p["wv"], d_vp)], axis=-1).astype(jnp.bfloat16)

        # proj weight (H*d_v, d_model) -> (H*d_vp, d_pad) with zero padded rows
        wo = p["wo"].reshape(H, d_v, D)
        wo = jnp.pad(wo, ((0, 0), (0, d_vp - d_v), (0, pad_d)))
        wo = wo.reshape(H * d_vp, d_pad).astype(jnp.bfloat16)

        packed.append(dict(
            wqkv=wqkv, wo=wo,
            attn_ln_a=jnp.pad(p["attn_ln_a"], ((0, 0), (0, pad_d))).astype(jnp.float32),
            attn_ln_b=jnp.pad(p["attn_ln_b"], ((0, 0), (0, pad_d))).astype(jnp.float32),
            w1=jnp.pad(p["w1"], ((0, pad_d), (0, d_ff_pad - d_ff))).astype(jnp.bfloat16),
            b1=jnp.pad(p["b1"], ((0, 0), (0, d_ff_pad - d_ff))).astype(jnp.float32),
            w2=jnp.pad(p["w2"], ((0, d_ff_pad - d_ff), (0, pad_d))).astype(jnp.bfloat16),
            b2=jnp.pad(p["b2"], ((0, 0), (0, pad_d))).astype(jnp.float32),
            ff_ln_a=jnp.pad(p["ff_ln_a"], ((0, 0), (0, pad_d))).astype(jnp.float32),
            ff_ln_b=jnp.pad(p["ff_ln_b"], ((0, 0), (0, pad_d))).astype(jnp.float32),
        ))
        cfg = dict(n_head=H, d_model=d_model, d_kp=d_kp, d_vp=d_vp,
                   d_pad=d_pad, d_ff_pad=d_ff_pad)
    return packed, cfg


def encoder_forward(res_padded, mask, packed_layers, *, cfg):
    """res_padded: [B, L, D] padded embeddings, mask: [B, L] (1.0 valid)."""
    B, L, D = res_padded.shape
    d_pad = cfg["d_pad"]
    l_pad = _round_up(max(L, 1), 16)             # bf16 sublane-packed seq dim
    bt, b_pad, vmem_limit = _plan_tiling(B, l_pad, cfg)

    # bf16 activation carry between layers (halves the HBM stream);
    # softmax / LayerNorm math stays in f32 inside the kernel.
    x = jnp.pad(res_padded.astype(jnp.bfloat16),
                ((0, b_pad - B), (0, l_pad - L), (0, d_pad - D)))
    m = jnp.pad(mask.astype(jnp.float32), ((0, b_pad - B), (0, l_pad - L)))
    mask_k = m.reshape(b_pad, 1, l_pad)

    for p in packed_layers:
        x = _fused_layer_call(x, mask_k, p, cfg, bt, vmem_limit)
    return x[:B, :L, :D].astype(jnp.float32)


if __name__ == "__main__":
    # Small configuration consistent with Encoder defaults (num_layers=1,
    # num_heads=2, d_positional=None, num_layers_position_only=0).
    D = 32       # d_model = embedding.d_embedding
    H = 2        # num_heads
    d_kv = 8     # d_k = d_v
    d_ff = 64
    vocab = 50
    lens = [8, 5]          # per-sentence lengths of the packed batch
    B = len(lens)
    L = max(lens)          # batch_idxs.max_len

    key = jax.random.PRNGKey(0)
    ks = jax.random.split(key, 12)

    def xavier(k, shape):
        fan_in, fan_out = shape[-2], shape[-1]
        std = (2.0 / (fan_in + fan_out)) ** 0.5
        return std * jax.random.normal(k, shape, jnp.float32)

    layer_params = [{
        "wq": xavier(ks[0], (H, D, d_kv)),
        "wk": xavier(ks[1], (H, D, d_kv)),
        "wv": xavier(ks[2], (H, D, d_kv)),
        # nn.Linear(H*d_v, D, bias=False) weight, stored transposed: (H*d_v, D)
        "wo": (1.0 / (H * d_kv) ** 0.5) * jax.random.normal(ks[3], (H * d_kv, D), jnp.float32),
        "attn_ln_a": jnp.ones((1, D), jnp.float32),
        "attn_ln_b": jnp.zeros((1, D), jnp.float32),
        # nn.Linear(D, d_ff) / nn.Linear(d_ff, D), weights stored transposed
        "w1": (1.0 / D ** 0.5) * jax.random.normal(ks[4], (D, d_ff), jnp.float32),
        "b1": (1.0 / D ** 0.5) * jax.random.normal(ks[5], (1, d_ff), jnp.float32),
        "w2": (1.0 / d_ff ** 0.5) * jax.random.normal(ks[6], (d_ff, D), jnp.float32),
        "b2": (1.0 / d_ff ** 0.5) * jax.random.normal(ks[7], (1, D), jnp.float32),
        "ff_ln_a": jnp.ones((1, D), jnp.float32),
        "ff_ln_b": jnp.zeros((1, D), jnp.float32),
    }]

    # Embedding stub (timing_signal unused since num_layers_position_only=0).
    T = sum(lens)
    xs = jax.random.randint(ks[8], (T,), 0, vocab)
    emb_table = 0.1 * jax.random.normal(ks[9], (vocab, D), jnp.float32)
    res_packed = emb_table[xs]                      # packed [T_total, D]

    # pad_and_rearrange equivalent: build padded [B, L, D] + validity mask.
    res_padded = jnp.zeros((B, L, D), jnp.float32)
    mask = jnp.zeros((B, L), jnp.float32)
    start = 0
    for i, ln in enumerate(lens):
        res_padded = res_padded.at[i, :ln].set(res_packed[start:start + ln])
        mask = mask.at[i, :ln].set(1.0)
        start += ln

    # Weight packing done once at model-load time; forward is jitted.
    packed_layers, cfg = prepare_encoder_params(layer_params, D)
    fwd = jax.jit(functools.partial(encoder_forward, cfg=cfg))

    out = fwd(res_padded, mask, packed_layers)
    out = jax.block_until_ready(out)
    assert out.shape == (B, L, D)
    assert bool(jnp.all(jnp.isfinite(out)))
    print("KERNEL_OK")
</pallas_src>

<mosaic_0001>
module attributes {stable_mosaic.version = 11 : i64} {
  func.func @encoder_layer_kernel(%arg0: i32, %arg1: memref<1x16x128xbf16, #tpu.memory_space<vmem>>, %arg2: memref<1x1x16xf32, #tpu.memory_space<vmem>>, %arg3: memref<128x768xbf16, #tpu.memory_space<vmem>>, %arg4: memref<256x128xbf16, #tpu.memory_space<vmem>>, %arg5: memref<1x128xf32, #tpu.memory_space<vmem>>, %arg6: memref<1x128xf32, #tpu.memory_space<vmem>>, %arg7: memref<128x128xbf16, #tpu.memory_space<vmem>>, %arg8: memref<1x128xf32, #tpu.memory_space<vmem>>, %arg9: memref<128x128xbf16, #tpu.memory_space<vmem>>, %arg10: memref<1x128xf32, #tpu.memory_space<vmem>>, %arg11: memref<1x128xf32, #tpu.memory_space<vmem>>, %arg12: memref<1x128xf32, #tpu.memory_space<vmem>>, %arg13: memref<1x16x128xbf16, #tpu.memory_space<vmem>>, %arg14: memref<16x256xbf16, #tpu.memory_space<vmem>>) attributes {dimension_semantics = [#tpu.dimension_semantics<parallel>], iteration_bounds = array<i64: 2>, scalar_prefetch = 0 : i64, scratch_operands = 1 : i64, tpu.core_type = #tpu.core_type<tc>, window_params = [{transform_indices = @transform_0, window_bounds = array<i64: 1, 16, 128>}, {transform_indices = @transform_1, window_bounds = array<i64: 1, 1, 16>}, {pipeline_mode = #tpu.pipeline_mode<synchronous>, transform_indices = @transform_2, window_bounds = array<i64: 128, 768>}, {pipeline_mode = #tpu.pipeline_mode<synchronous>, transform_indices = @transform_3, window_bounds = array<i64: 256, 128>}, {pipeline_mode = #tpu.pipeline_mode<synchronous>, transform_indices = @transform_4, window_bounds = array<i64: 1, 128>}, {pipeline_mode = #tpu.pipeline_mode<synchronous>, transform_indices = @transform_5, window_bounds = array<i64: 1, 128>}, {pipeline_mode = #tpu.pipeline_mode<synchronous>, transform_indices = @transform_6, window_bounds = array<i64: 128, 128>}, {pipeline_mode = #tpu.pipeline_mode<synchronous>, transform_indices = @transform_7, window_bounds = array<i64: 1, 128>}, {pipeline_mode = #tpu.pipeline_mode<synchronous>, transform_indices = @transform_8, window_bounds = array<i64: 128, 128>}, {pipeline_mode = #tpu.pipeline_mode<synchronous>, transform_indices = @transform_9, window_bounds = array<i64: 1, 128>}, {pipeline_mode = #tpu.pipeline_mode<synchronous>, transform_indices = @transform_10, window_bounds = array<i64: 1, 128>}, {pipeline_mode = #tpu.pipeline_mode<synchronous>, transform_indices = @transform_11, window_bounds = array<i64: 1, 128>}, {transform_indices = @transform_12, window_bounds = array<i64: 1, 16, 128>}]} {
    %c0 = arith.constant 0 : index
    %c0_0 = arith.constant 0 : index
    %c0_1 = arith.constant 0 : index
    %0 = vector.load %arg1[%c0, %c0_0, %c0_1] : memref<1x16x128xbf16, #tpu.memory_space<vmem>>, vector<1x16x128xbf16>
    %1 = vector.shape_cast %0 : vector<1x16x128xbf16> to vector<16x128xbf16>
    %c0_2 = arith.constant 0 : index
    %c0_3 = arith.constant 0 : index
    %c0_4 = arith.constant 0 : index
    %2 = vector.load %arg2[%c0_2, %c0_3, %c0_4] : memref<1x1x16xf32, #tpu.memory_space<vmem>>, vector<1x1x16xf32>
    %3 = tpu.iota {dimensions = array<i32: 1>} : vector<1x128xi32>
    %c32_i32 = arith.constant 32 : i32
    %4 = vector.broadcast %c32_i32 : i32 to vector<1x128xi32>
    %5 = arith.cmpi slt, %3, %4 : vector<1x128xi32>
    %6 = arith.extui %5 : vector<1x128xi1> to vector<1x128xi32>
    %7 = arith.sitofp %6 : vector<1x128xi32> to vector<1x128xf32>
    %c0_5 = arith.constant 0 : index
    %c0_6 = arith.constant 0 : index
    %8 = vector.load %arg3[%c0_5, %c0_6] : memref<128x768xbf16, #tpu.memory_space<vmem>>, vector<128x768xbf16>
    %cst = arith.constant dense<0.000000e+00> : vector<16x768xf32>
    %9 = tpu.matmul %1, %8, %cst {dimension_numbers = #tpu.dot_dimension_numbers<[1], [0], [0], [1], [0, 0, 1, 1], [], []>} : vector<16x128xbf16>, vector<128x768xbf16>, vector<16x768xf32> -> vector<16x768xf32>
    %10 = arith.truncf %9 : vector<16x768xf32> to vector<16x768xbf16>
    %cst_7 = arith.constant 1.000000e+00 : f32
    %11 = vector.broadcast %cst_7 : f32 to vector<1x1x16xf32>
    %12 = arith.subf %11, %2 : vector<1x1x16xf32>
    %cst_8 = arith.constant -1.000000e+09 : f32
    %13 = vector.broadcast %cst_8 : f32 to vector<1x1x16xf32>
    %14 = arith.mulf %12, %13 : vector<1x1x16xf32>
    %15 = vector.extract_strided_slice %10 {offsets = [0, 0], sizes = [16, 128], strides = [1, 1]} : vector<16x768xbf16> to vector<16x128xbf16>
    %16 = vector.shape_cast %15 : vector<16x128xbf16> to vector<1x16x128xbf16>
    %17 = vector.extract_strided_slice %10 {offsets = [0, 256], sizes = [16, 128], strides = [1, 1]} : vector<16x768xbf16> to vector<16x128xbf16>
    %18 = vector.shape_cast %17 : vector<16x128xbf16> to vector<1x16x128xbf16>
    %19 = vector.extract_strided_slice %10 {offsets = [0, 512], sizes = [16, 128], strides = [1, 1]} : vector<16x768xbf16> to vector<16x128xbf16>
    %20 = vector.shape_cast %19 : vector<16x128xbf16> to vector<1x16x128xbf16>
    "tpu.trace_start"() <{level = 10 : i32, message = "blk,bmk->blm"}> : () -> ()
    %cst_9 = arith.constant dense<0.000000e+00> : vector<1x16x16xf32>
    %21 = tpu.matmul %16, %18, %cst_9 {dimension_numbers = #tpu.dot_dimension_numbers<[2], [2], [1], [1], [0, 0, 0, 1, 1, 1], [0], [0]>} : vector<1x16x128xbf16>, vector<1x16x128xbf16>, vector<1x16x16xf32> -> vector<1x16x16xf32>
    "tpu.trace_stop"() : () -> ()
    %22 = vector.broadcast %14 : vector<1x1x16xf32> to vector<1x16x16xf32>
    %23 = arith.addf %21, %22 : vector<1x16x16xf32>
    %cst_10 = arith.constant dense<0xFF800000> : vector<1x16xf32>
    %24 = vector.multi_reduction <maximumf>, %23, %cst_10 [2] : vector<1x16x16xf32> to vector<1x16xf32>
    %25 = vector.shape_cast %24 : vector<1x16xf32> to vector<1x16x1xf32>
    %26 = vector.broadcast %25 : vector<1x16x1xf32> to vector<1x16x16xf32>
    %27 = arith.subf %23, %26 : vector<1x16x16xf32>
    %28 = math.exp %27 : vector<1x16x16xf32>
    %cst_11 = arith.constant dense<0.000000e+00> : vector<1x16xf32>
    %29 = vector.multi_reduction <add>, %28, %cst_11 [2] : vector<1x16x16xf32> to vector<1x16xf32>
    %30 = vector.shape_cast %29 : vector<1x16xf32> to vector<1x16x1xf32>
    %31 = tpu.reciprocal %30 {approx = true} : vector<1x16x1xf32> -> vector<1x16x1xf32>
    %32 = vector.broadcast %31 : vector<1x16x1xf32> to vector<1x16x16xf32>
    %33 = arith.mulf %28, %32 : vector<1x16x16xf32>
    %34 = arith.truncf %33 : vector<1x16x16xf32> to vector<1x16x16xbf16>
    "tpu.trace_start"() <{level = 10 : i32, message = "blm,bmv->blv"}> : () -> ()
    %cst_12 = arith.constant dense<0.000000e+00> : vector<1x16x128xf32>
    %35 = tpu.matmul %34, %20, %cst_12 {dimension_numbers = #tpu.dot_dimension_numbers<[2], [1], [1], [2], [0, 0, 0, 1, 1, 2], [0], [0]>} : vector<1x16x16xbf16>, vector<1x16x128xbf16>, vector<1x16x128xf32> -> vector<1x16x128xf32>
    "tpu.trace_stop"() : () -> ()
    %36 = vector.shape_cast %35 : vector<1x16x128xf32> to vector<16x128xf32>
    %37 = arith.truncf %36 : vector<16x128xf32> to vector<16x128xbf16>
    %c0_13 = arith.constant 0 : index
    %c0_14 = arith.constant 0 : index
    %38 = vector.load %arg14[%c0_13, %c0_14] : memref<16x256xbf16, #tpu.memory_space<vmem>>, vector<16x128xbf16>
    tpu.vector_store %arg14[%c0_13, %c0_14], %37 {strides = array<i32>} : memref<16x256xbf16, #tpu.memory_space<vmem>>, vector<16x128xbf16>,
    %39 = vector.extract_strided_slice %10 {offsets = [0, 128], sizes = [16, 128], strides = [1, 1]} : vector<16x768xbf16> to vector<16x128xbf16>
    %40 = vector.shape_cast %39 : vector<16x128xbf16> to vector<1x16x128xbf16>
    %41 = vector.extract_strided_slice %10 {offsets = [0, 384], sizes = [16, 128], strides = [1, 1]} : vector<16x768xbf16> to vector<16x128xbf16>
    %42 = vector.shape_cast %41 : vector<16x128xbf16> to vector<1x16x128xbf16>
    %43 = vector.extract_strided_slice %10 {offsets = [0, 640], sizes = [16, 128], strides = [1, 1]} : vector<16x768xbf16> to vector<16x128xbf16>
    %44 = vector.shape_cast %43 : vector<16x128xbf16> to vector<1x16x128xbf16>
    "tpu.trace_start"() <{level = 10 : i32, message = "blk,bmk->blm"}> : () -> ()
    %cst_15 = arith.constant dense<0.000000e+00> : vector<1x16x16xf32>
    %45 = tpu.matmul %40, %42, %cst_15 {dimension_numbers = #tpu.dot_dimension_numbers<[2], [2], [1], [1], [0, 0, 0, 1, 1, 1], [0], [0]>} : vector<1x16x128xbf16>, vector<1x16x128xbf16>, vector<1x16x16xf32> -> vector<1x16x16xf32>
    "tpu.trace_stop"() : () -> ()
    %46 = vector.broadcast %14 : vector<1x1x16xf32> to vector<1x16x16xf32>
    %47 = arith.addf %45, %46 : vector<1x16x16xf32>
    %cst_16 = arith.constant dense<0xFF800000> : vector<1x16xf32>
    %48 = vector.multi_reduction <maximumf>, %47, %cst_16 [2] : vector<1x16x16xf32> to vector<1x16xf32>
    %49 = vector.shape_cast %48 : vector<1x16xf32> to vector<1x16x1xf32>
    %50 = vector.broadcast %49 : vector<1x16x1xf32> to vector<1x16x16xf32>
    %51 = arith.subf %47, %50 : vector<1x16x16xf32>
    %52 = math.exp %51 : vector<1x16x16xf32>
    %cst_17 = arith.constant dense<0.000000e+00> : vector<1x16xf32>
    %53 = vector.multi_reduction <add>, %52, %cst_17 [2] : vector<1x16x16xf32> to vector<1x16xf32>
    %54 = vector.shape_cast %53 : vector<1x16xf32> to vector<1x16x1xf32>
    %55 = tpu.reciprocal %54 {approx = true} : vector<1x16x1xf32> -> vector<1x16x1xf32>
    %56 = vector.broadcast %55 : vector<1x16x1xf32> to vector<1x16x16xf32>
    %57 = arith.mulf %52, %56 : vector<1x16x16xf32>
    %58 = arith.truncf %57 : vector<1x16x16xf32> to vector<1x16x16xbf16>
    "tpu.trace_start"() <{level = 10 : i32, message = "blm,bmv->blv"}> : () -> ()
    %cst_18 = arith.constant dense<0.000000e+00> : vector<1x16x128xf32>
    %59 = tpu.matmul %58, %44, %cst_18 {dimension_numbers = #tpu.dot_dimension_numbers<[2], [1], [1], [2], [0, 0, 0, 1, 1, 2], [0], [0]>} : vector<1x16x16xbf16>, vector<1x16x128xbf16>, vector<1x16x128xf32> -> vector<1x16x128xf32>
    "tpu.trace_stop"() : () -> ()
    %60 = vector.shape_cast %59 : vector<1x16x128xf32> to vector<16x128xf32>
    %61 = arith.truncf %60 : vector<16x128xf32> to vector<16x128xbf16>
    %c0_19 = arith.constant 0 : index
    %c128 = arith.constant 128 : index
    %62 = vector.load %arg14[%c0_19, %c128] : memref<16x256xbf16, #tpu.memory_space<vmem>>, vector<16x128xbf16>
    tpu.vector_store %arg14[%c0_19, %c128], %61 {strides = array<i32>} : memref<16x256xbf16, #tpu.memory_space<vmem>>, vector<16x128xbf16>,
    %c0_20 = arith.constant 0 : index
    %c0_21 = arith.constant 0 : index
    %63 = vector.load %arg14[%c0_20, %c0_21] : memref<16x256xbf16, #tpu.memory_space<vmem>>, vector<16x256xbf16>
    %c0_22 = arith.constant 0 : index
    %c0_23 = arith.constant 0 : index
    %64 = vector.load %arg4[%c0_22, %c0_23] : memref<256x128xbf16, #tpu.memory_space<vmem>>, vector<256x128xbf16>
    %cst_24 = arith.constant dense<0.000000e+00> : vector<16x128xf32>
    %65 = tpu.matmul %63, %64, %cst_24 {dimension_numbers = #tpu.dot_dimension_numbers<[1], [0], [0], [1], [0, 0, 1, 1], [], []>} : vector<16x256xbf16>, vector<256x128xbf16>, vector<16x128xf32> -> vector<16x128xf32>
    %66 = arith.extf %1 : vector<16x128xbf16> to vector<16x128xf32>
    %67 = arith.addf %65, %66 : vector<16x128xf32>
    %c0_25 = arith.constant 0 : index
    %c0_26 = arith.constant 0 : index
    %68 = vector.load %arg5[%c0_25, %c0_26] : memref<1x128xf32, #tpu.memory_space<vmem>>, vector<1x128xf32>
    %c0_27 = arith.constant 0 : index
    %c0_28 = arith.constant 0 : index
    %69 = vector.load %arg6[%c0_27, %c0_28] : memref<1x128xf32, #tpu.memory_space<vmem>>, vector<1x128xf32>
    %70 = vector.broadcast %7 : vector<1x128xf32> to vector<16x128xf32>
    %71 = arith.mulf %67, %70 : vector<16x128xf32>
    %cst_29 = arith.constant dense<0.000000e+00> : vector<16xf32>
    %72 = vector.multi_reduction <add>, %71, %cst_29 [1] : vector<16x128xf32> to vector<16xf32>
    %73 = vector.shape_cast %72 : vector<16xf32> to vector<16x1xf32>
    %cst_30 = arith.constant 3.125000e-02 : f32
    %74 = vector.broadcast %cst_30 : f32 to vector<16x1xf32>
    %75 = arith.mulf %73, %74 : vector<16x1xf32>
    %76 = vector.broadcast %75 : vector<16x1xf32> to vector<16x128xf32>
    %77 = arith.subf %67, %76 : vector<16x128xf32>
    %78 = vector.broadcast %7 : vector<1x128xf32> to vector<16x128xf32>
    %79 = arith.mulf %77, %78 : vector<16x128xf32>
    %80 = arith.mulf %79, %79 : vector<16x128xf32>
    %cst_31 = arith.constant dense<0.000000e+00> : vector<16xf32>
    %81 = vector.multi_reduction <add>, %80, %cst_31 [1] : vector<16x128xf32> to vector<16xf32>
    %82 = vector.shape_cast %81 : vector<16xf32> to vector<16x1xf32>
    %cst_32 = arith.constant 0.0322580636 : f32
    %83 = vector.broadcast %cst_32 : f32 to vector<16x1xf32>
    %84 = arith.mulf %82, %83 : vector<16x1xf32>
    %85 = math.sqrt %84 : vector<16x1xf32>
    %cst_33 = arith.constant 1.000000e-03 : f32
    %86 = vector.broadcast %cst_33 : f32 to vector<16x1xf32>
    %87 = arith.addf %85, %86 : vector<16x1xf32>
    %cst_34 = arith.constant 1.000000e+00 : f32
    %88 = vector.broadcast %cst_34 : f32 to vector<16x1xf32>
    %89 = arith.divf %88, %87 : vector<16x1xf32>
    %90 = vector.broadcast %75 : vector<16x1xf32> to vector<16x128xf32>
    %91 = arith.subf %67, %90 : vector<16x128xf32>
    %92 = vector.broadcast %89 : vector<16x1xf32> to vector<16x128xf32>
    %93 = arith.mulf %91, %92 : vector<16x128xf32>
    %94 = vector.broadcast %68 : vector<1x128xf32> to vector<16x128xf32>
    %95 = arith.mulf %93, %94 : vector<16x128xf32>
    %96 = vector.broadcast %69 : vector<1x128xf32> to vector<16x128xf32>
    %97 = arith.addf %95, %96 : vector<16x128xf32>
    %98 = arith.truncf %97 : vector<16x128xf32> to vector<16x128xbf16>
    %c0_35 = arith.constant 0 : index
    %c0_36 = arith.constant 0 : index
    %99 = vector.load %arg7[%c0_35, %c0_36] : memref<128x128xbf16, #tpu.memory_space<vmem>>, vector<128x128xbf16>
    %cst_37 = arith.constant dense<0.000000e+00> : vector<16x128xf32>
    %100 = tpu.matmul %98, %99, %cst_37 {dimension_numbers = #tpu.dot_dimension_numbers<[1], [0], [0], [1], [0, 0, 1, 1], [], []>} : vector<16x128xbf16>, vector<128x128xbf16>, vector<16x128xf32> -> vector<16x128xf32>
    %c0_38 = arith.constant 0 : index
    %c0_39 = arith.constant 0 : index
    %101 = vector.load %arg8[%c0_38, %c0_39] : memref<1x128xf32, #tpu.memory_space<vmem>>, vector<1x128xf32>
    %102 = vector.broadcast %101 : vector<1x128xf32> to vector<16x128xf32>
    %103 = arith.addf %100, %102 : vector<16x128xf32>
    %cst_40 = arith.constant 0.000000e+00 : f32
    %104 = vector.broadcast %cst_40 : f32 to vector<16x128xf32>
    %105 = arith.maximumf %103, %104 : vector<16x128xf32>
    %106 = arith.truncf %105 : vector<16x128xf32> to vector<16x128xbf16>
    %c0_41 = arith.constant 0 : index
    %c0_42 = arith.constant 0 : index
    %107 = vector.load %arg9[%c0_41, %c0_42] : memref<128x128xbf16, #tpu.memory_space<vmem>>, vector<128x128xbf16>
    %cst_43 = arith.constant dense<0.000000e+00> : vector<16x128xf32>
    %108 = tpu.matmul %106, %107, %cst_43 {dimension_numbers = #tpu.dot_dimension_numbers<[1], [0], [0], [1], [0, 0, 1, 1], [], []>} : vector<16x128xbf16>, vector<128x128xbf16>, vector<16x128xf32> -> vector<16x128xf32>
    %c0_44 = arith.constant 0 : index
    %c0_45 = arith.constant 0 : index
    %109 = vector.load %arg10[%c0_44, %c0_45] : memref<1x128xf32, #tpu.memory_space<vmem>>, vector<1x128xf32>
    %110 = vector.broadcast %109 : vector<1x128xf32> to vector<16x128xf32>
    %111 = arith.addf %108, %110 : vector<16x128xf32>
    %112 = arith.addf %111, %97 : vector<16x128xf32>
    %c0_46 = arith.constant 0 : index
    %c0_47 = arith.constant 0 : index
    %113 = vector.load %arg11[%c0_46, %c0_47] : memref<1x128xf32, #tpu.memory_space<vmem>>, vector<1x128xf32>
    %c0_48 = arith.constant 0 : index
    %c0_49 = arith.constant 0 : index
    %114 = vector.load %arg12[%c0_48, %c0_49] : memref<1x128xf32, #tpu.memory_space<vmem>>, vector<1x128xf32>
    %115 = vector.broadcast %7 : vector<1x128xf32> to vector<16x128xf32>
    %116 = arith.mulf %112, %115 : vector<16x128xf32>
    %cst_50 = arith.constant dense<0.000000e+00> : vector<16xf32>
    %117 = vector.multi_reduction <add>, %116, %cst_50 [1] : vector<16x128xf32> to vector<16xf32>
    %118 = vector.shape_cast %117 : vector<16xf32> to vector<16x1xf32>
    %cst_51 = arith.constant 3.125000e-02 : f32
    %119 = vector.broadcast %cst_51 : f32 to vector<16x1xf32>
    %120 = arith.mulf %118, %119 : vector<16x1xf32>
    %121 = vector.broadcast %120 : vector<16x1xf32> to vector<16x128xf32>
    %122 = arith.subf %112, %121 : vector<16x128xf32>
    %123 = vector.broadcast %7 : vector<1x128xf32> to vector<16x128xf32>
    %124 = arith.mulf %122, %123 : vector<16x128xf32>
    %125 = arith.mulf %124, %124 : vector<16x128xf32>
    %cst_52 = arith.constant dense<0.000000e+00> : vector<16xf32>
    %126 = vector.multi_reduction <add>, %125, %cst_52 [1] : vector<16x128xf32> to vector<16xf32>
    %127 = vector.shape_cast %126 : vector<16xf32> to vector<16x1xf32>
    %cst_53 = arith.constant 0.0322580636 : f32
    %128 = vector.broadcast %cst_53 : f32 to vector<16x1xf32>
    %129 = arith.mulf %127, %128 : vector<16x1xf32>
    %130 = math.sqrt %129 : vector<16x1xf32>
    %cst_54 = arith.constant 1.000000e-03 : f32
    %131 = vector.broadcast %cst_54 : f32 to vector<16x1xf32>
    %132 = arith.addf %130, %131 : vector<16x1xf32>
    %cst_55 = arith.constant 1.000000e+00 : f32
    %133 = vector.broadcast %cst_55 : f32 to vector<16x1xf32>
    %134 = arith.divf %133, %132 : vector<16x1xf32>
    %135 = vector.broadcast %120 : vector<16x1xf32> to vector<16x128xf32>
    %136 = arith.subf %112, %135 : vector<16x128xf32>
    %137 = vector.broadcast %134 : vector<16x1xf32> to vector<16x128xf32>
    %138 = arith.mulf %136, %137 : vector<16x128xf32>
    %139 = vector.broadcast %113 : vector<1x128xf32> to vector<16x128xf32>
    %140 = arith.mulf %138, %139 : vector<16x128xf32>
    %141 = vector.broadcast %114 : vector<1x128xf32> to vector<16x128xf32>
    %142 = arith.addf %140, %141 : vector<16x128xf32>
    %143 = vector.shape_cast %142 : vector<16x128xf32> to vector<1x16x128xf32>
    %144 = arith.truncf %143 : vector<1x16x128xf32> to vector<1x16x128xbf16>
    %c0_56 = arith.constant 0 : index
    %c0_57 = arith.constant 0 : index
    %c0_58 = arith.constant 0 : index
    %145 = vector.load %arg13[%c0_56, %c0_57, %c0_58] : memref<1x16x128xbf16, #tpu.memory_space<vmem>>, vector<1x16x128xbf16>
    tpu.vector_store %arg13[%c0_56, %c0_57, %c0_58], %144 {strides = array<i32>} : memref<1x16x128xbf16, #tpu.memory_space<vmem>>, vector<1x16x128xbf16>,
    return
  }
  func.func @transform_0(%arg0: i32) -> (i32, i32, i32) {
    %c0_i32 = arith.constant 0 : i32
    %c0_i32_0 = arith.constant 0 : i32
    %c0_i32_1 = arith.constant 0 : i32
    return %arg0, %c0_i32, %c0_i32_0 : i32, i32, i32
  }
  func.func @transform_1(%arg0: i32) -> (i32, i32, i32) {
    %c0_i32 = arith.constant 0 : i32
    %c0_i32_0 = arith.constant 0 : i32
    %c0_i32_1 = arith.constant 0 : i32
    return %arg0, %c0_i32, %c0_i32_0 : i32, i32, i32
  }
  func.func @transform_2(%arg0: i32) -> (i32, i32) {
    %c0_i32 = arith.constant 0 : i32
    %c0_i32_0 = arith.constant 0 : i32
    %c0_i32_1 = arith.constant 0 : i32
    return %c0_i32, %c0_i32_0 : i32, i32
  }
  func.func @transform_3(%arg0: i32) -> (i32, i32) {
    %c0_i32 = arith.constant 0 : i32
    %c0_i32_0 = arith.constant 0 : i32
    %c0_i32_1 = arith.constant 0 : i32
    return %c0_i32, %c0_i32_0 : i32, i32
  }
  func.func @transform_4(%arg0: i32) -> (i32, i32) {
    %c0_i32 = arith.constant 0 : i32
    %c0_i32_0 = arith.constant 0 : i32
    %c0_i32_1 = arith.constant 0 : i32
    return %c0_i32, %c0_i32_0 : i32, i32
  }
  func.func @transform_5(%arg0: i32) -> (i32, i32) {
    %c0_i32 = arith.constant 0 : i32
    %c0_i32_0 = arith.constant 0 : i32
    %c0_i32_1 = arith.constant 0 : i32
    return %c0_i32, %c0_i32_0 : i32, i32
  }
  func.func @transform_6(%arg0: i32) -> (i32, i32) {
    %c0_i32 = arith.constant 0 : i32
    %c0_i32_0 = arith.constant 0 : i32
    %c0_i32_1 = arith.constant 0 : i32
    return %c0_i32, %c0_i32_0 : i32, i32
  }
  func.func @transform_7(%arg0: i32) -> (i32, i32) {
    %c0_i32 = arith.constant 0 : i32
    %c0_i32_0 = arith.constant 0 : i32
    %c0_i32_1 = arith.constant 0 : i32
    return %c0_i32, %c0_i32_0 : i32, i32
  }
  func.func @transform_8(%arg0: i32) -> (i32, i32) {
    %c0_i32 = arith.constant 0 : i32
    %c0_i32_0 = arith.constant 0 : i32
    %c0_i32_1 = arith.constant 0 : i32
    return %c0_i32, %c0_i32_0 : i32, i32
  }
  func.func @transform_9(%arg0: i32) -> (i32, i32) {
    %c0_i32 = arith.constant 0 : i32
    %c0_i32_0 = arith.constant 0 : i32
    %c0_i32_1 = arith.constant 0 : i32
    return %c0_i32, %c0_i32_0 : i32, i32
  }
  func.func @transform_10(%arg0: i32) -> (i32, i32) {
    %c0_i32 = arith.constant 0 : i32
    %c0_i32_0 = arith.constant 0 : i32
    %c0_i32_1 = arith.constant 0 : i32
    return %c0_i32, %c0_i32_0 : i32, i32
  }
  func.func @transform_11(%arg0: i32) -> (i32, i32) {
    %c0_i32 = arith.constant 0 : i32
    %c0_i32_0 = arith.constant 0 : i32
    %c0_i32_1 = arith.constant 0 : i32
    return %c0_i32, %c0_i32_0 : i32, i32
  }
  func.func @transform_12(%arg0: i32) -> (i32, i32, i32) {
    %c0_i32 = arith.constant 0 : i32
    %c0_i32_0 = arith.constant 0 : i32
    %c0_i32_1 = arith.constant 0 : i32
    return %arg0, %c0_i32, %c0_i32_0 : i32, i32, i32
  }
}

</mosaic_0001>

<llo_original>
// kernel: encoder_forward.1
$region0: #{encoder_forward.1}
  #allocation0 [shape = 'u32[]', space=smem, size = 0x4, offset = 0x4, fixed_abs, tag = 'smem constant byte address 0x4 - core index']
  #allocation1 [shape = 'u32[144,128]{1,0:T(1,128)}', space=vmem, size = 0x12000, scoped, tag = 'internal scratch']
  #allocation2 [shape = 'bf16[16,256]{1,0:T(16,128)(2,1)}', space=vmem, size = 0x2000, scoped, tag = 'scratch operand']
  %s0 = inlined_call_operand.vmem [shape: bf16[2,16,128], index: 0, kind: input, shape index: {}]
  %s1 = inlined_call_operand.vmem [shape: f32[2,1,16], index: 1, kind: input, shape index: {}]
  %s2 = inlined_call_operand.hbm [shape: bf16[128,768], index: 2, kind: input, shape index: {}]
  %s3 = inlined_call_operand.hbm [shape: bf16[256,128], index: 3, kind: input, shape index: {}]
  %s4 = inlined_call_operand.vmem [shape: f32[1,128], index: 4, kind: input, shape index: {}]
  %s5 = inlined_call_operand.vmem [shape: f32[1,128], index: 5, kind: input, shape index: {}]
  %s6 = inlined_call_operand.vmem [shape: bf16[128,128], index: 6, kind: input, shape index: {}]
  %s7 = inlined_call_operand.vmem [shape: f32[1,128], index: 7, kind: input, shape index: {}]
  %s8 = inlined_call_operand.hbm [shape: bf16[128,128], index: 8, kind: input, shape index: {}]
  %s9 = inlined_call_operand.vmem [shape: f32[1,128], index: 9, kind: input, shape index: {}]
  %s10 = inlined_call_operand.vmem [shape: f32[1,128], index: 10, kind: input, shape index: {}]
  %s11 = inlined_call_operand.vmem [shape: f32[1,128], index: 11, kind: input, shape index: {}]
  %s12 = inlined_call_operand.vmem [shape: bf16[2,16,128], index: 12, kind: output, shape index: {}]
  %s13 = sld [smem:[#allocation0]]
  $region93: #{encoder_forward.1} parent=0
    _
  %s15 = ssub.s32 1, %s13
  %s16 = scalar_select 0, %s15, %s13
  $region1: #{encoder_forward.1} parent=0
    #allocation3 [shape = 'u8[196608]{0}', space=vmem, size = 0x30000, scoped, tag = 'input window, operand 2, single buffered']
    #allocation4 [shape = 's32[2]{0}', space=sflag, size = 0x8, scoped, tag = 'scoped memory for encoder_forward.1']
    #allocation5 [shape = 'u8[65536]{0}', space=vmem, size = 0x10000, scoped, tag = 'input window, operand 3, single buffered']
    #allocation6 [shape = 's32[1]{0}', space=sflag, size = 0x4, scoped, tag = 'scoped memory for encoder_forward.1']
    #allocation7 [shape = 'u8[32768]{0}', space=vmem, size = 0x8000, scoped, tag = 'input window, operand 8, single buffered']
    %17 = vsyncpa [#allocation4], 0
    %18 = vsyncpa [#allocation6], 0
    loop: start=0, step=1, limit=4
    $region2: #{encoder_forward.1} parent=1 // loop_pre_header
      _
    $region3: #{encoder_forward.1} parent=1 // loop_header
      %s20 = sphi 0, %s24
      %p21 = scmp.ge.s32.totalorder %s20, 4
      %s30 = sphi 0, %s32
      %s33 = sphi 0, %s30
      %s34 = sphi 0, %s33
      %s50 = sphi 0, %s34
      %s56 = sphi 0, %s58
      %s59 = sphi 0, %s56
      %s60 = sphi 0, %s59
      %s76 = sphi 0, %s60
      %s80 = sphi 0, %s80
      %s82 = sphi 0, %s80
      %s83 = sphi 0, %s82
      %s97 = sphi 0, %s83
      %s101 = sphi 0, %s101
      %s103 = sphi 0, %s101
      %s104 = sphi 0, %s103
      %s118 = sphi 0, %s104
      %s122 = sphi 0, %s122
      %s124 = sphi 0, %s122
      %s125 = sphi 0, %s124
      %s139 = sphi 0, %s125
      %s143 = sphi 0, %s143
      %s145 = sphi 0, %s143
      %s146 = sphi 0, %s145
      %s160 = sphi 0, %s146
      %s164 = sphi 0, %s164
      %s166 = sphi 0, %s164
      %s167 = sphi 0, %s166
      %s181 = sphi 0, %s167
      %s185 = sphi 0, %s185
      %s187 = sphi 0, %s185
      %s188 = sphi 0, %s187
      %s202 = sphi 0, %s188
      %s206 = sphi 0, %s206
      %s208 = sphi 0, %s206
      %s209 = sphi 0, %s208
      %s223 = sphi 0, %s209
      %s227 = sphi 0, %s227
      %s229 = sphi 0, %s227
      %s230 = sphi 0, %s229
      %s244 = sphi 0, %s230
      %s248 = sphi 0, %s248
      %s250 = sphi 0, %s248
      %s251 = sphi 0, %s250
      %s265 = sphi 0, %s251
      %s269 = sphi 0, %s269
      %s271 = sphi 0, %s269
      %s272 = sphi 0, %s271
      %s286 = sphi 0, %s272
      %s292 = sphi 0, %s294
      %s295 = sphi 0, %s292
      %s296 = sphi 0, %s295
      %s312 = sphi 0, %s296
    $region4: #{encoder_forward.1} parent=1 // loop_header_branch
      %23 = sbr.rel (%p21) target = $region8
    $region5: #{encoder_forward.1} parent=1 // loop_body
      %s25 = ssub.s32 %s20, 1
      %s26 = ssub.s32 %s20, 2
      %s27 = sadd.s32 %s20, 1
      %s28 = ssub.s32 %s20, %s27
      %p29 = scmp.eq.s32.totalorder %s28, 0
      %s31 = sadd.s32 %s30, 1
      %s32 = scalar_select %p29, %s30, %s31
      %p35 = pneg %p29
      %p36 = scmp.eq.s32.totalorder %s20, 1
      %p37 = por %p35, %p36
      %p38 = scmp.ne.s32.totalorder %s30, %s33
      %p39 = scmp.eq.s32.totalorder %s20, 0
      %p40 = por %p38, %p39
      %p41 = scmp.ne.s32.totalorder %s30, %s33
      %p42 = scmp.eq.s32.totalorder %s25, 1
      %p43 = por %p41, %p42
      %p44 = scmp.ne.s32.totalorder %s33, %s34
      %p45 = scmp.eq.s32.totalorder %s25, 0
      %p46 = por %p44, %p45
      %p47 = scmp.ne.s32.totalorder %s33, %s34
      %p48 = scmp.eq.s32.totalorder %s26, 1
      %p49 = por %p47, %p48
      %p51 = scmp.ne.s32.totalorder %s34, %s50
      %p52 = scmp.eq.s32.totalorder %s26, 0
      %p53 = por %p51, %p52
      %s54 = ssub.s32 %s20, %s27
      %p55 = scmp.eq.s32.totalorder %s54, 0
      %s57 = sadd.s32 %s56, 1
      %s58 = scalar_select %p55, %s56, %s57
      %p61 = pneg %p55
      %p62 = scmp.eq.s32.totalorder %s20, 1
      %p63 = por %p61, %p62
      %p64 = scmp.ne.s32.totalorder %s56, %s59
      %p65 = scmp.eq.s32.totalorder %s20, 0
      %p66 = por %p64, %p65
      %p67 = scmp.ne.s32.totalorder %s56, %s59
      %p68 = scmp.eq.s32.totalorder %s25, 1
      %p69 = por %p67, %p68
      %p70 = scmp.ne.s32.totalorder %s59, %s60
      %p71 = scmp.eq.s32.totalorder %s25, 0
      %p72 = por %p70, %p71
      %p73 = scmp.ne.s32.totalorder %s59, %s60
      %p74 = scmp.eq.s32.totalorder %s26, 1
      %p75 = por %p73, %p74
      %p77 = scmp.ne.s32.totalorder %s60, %s76
      %p78 = scmp.eq.s32.totalorder %s26, 0
      %p79 = por %p77, %p78
      %s81 = sadd.s32 %s80, 1
      %p84 = scmp.eq.s32.totalorder %s20, 1
      %p85 = scmp.ne.s32.totalorder %s80, %s82
      %p86 = scmp.eq.s32.totalorder %s20, 0
      %p87 = por %p85, %p86
      %p88 = scmp.ne.s32.totalorder %s80, %s82
      %p89 = scmp.eq.s32.totalorder %s25, 1
      %p90 = por %p88, %p89
      %p91 = scmp.ne.s32.totalorder %s82, %s83
      %p92 = scmp.eq.s32.totalorder %s25, 0
      %p93 = por %p91, %p92
      %p94 = scmp.ne.s32.totalorder %s82, %s83
      %p95 = scmp.eq.s32.totalorder %s26, 1
      %p96 = por %p94, %p95
      %p98 = scmp.ne.s32.totalorder %s83, %s97
      %p99 = scmp.eq.s32.totalorder %s26, 0
      %p100 = por %p98, %p99
      %s102 = sadd.s32 %s101, 1
      %p105 = scmp.eq.s32.totalorder %s20, 1
      %p106 = scmp.ne.s32.totalorder %s101, %s103
      %p107 = scmp.eq.s32.totalorder %s20, 0
      %p108 = por %p106, %p107
      %p109 = scmp.ne.s32.totalorder %s101, %s103
      %p110 = scmp.eq.s32.totalorder %s25, 1
      %p111 = por %p109, %p110
      %p112 = scmp.ne.s32.totalorder %s103, %s104
      %p113 = scmp.eq.s32.totalorder %s25, 0
      %p114 = por %p112, %p113
      %p115 = scmp.ne.s32.totalorder %s103, %s104
      %p116 = scmp.eq.s32.totalorder %s26, 1
      %p117 = por %p115, %p116
      %p119 = scmp.ne.s32.totalorder %s104, %s118
      %p120 = scmp.eq.s32.totalorder %s26, 0
      %p121 = por %p119, %p120
      %s123 = sadd.s32 %s122, 1
      %p126 = scmp.eq.s32.totalorder %s20, 1
      %p127 = scmp.ne.s32.totalorder %s122, %s124
      %p128 = scmp.eq.s32.totalorder %s20, 0
      %p129 = por %p127, %p128
      %p130 = scmp.ne.s32.totalorder %s122, %s124
      %p131 = scmp.eq.s32.totalorder %s25, 1
      %p132 = por %p130, %p131
      %p133 = scmp.ne.s32.totalorder %s124, %s125
      %p134 = scmp.eq.s32.totalorder %s25, 0
      %p135 = por %p133, %p134
      %p136 = scmp.ne.s32.totalorder %s124, %s125
      %p137 = scmp.eq.s32.totalorder %s26, 1
      %p138 = por %p136, %p137
      %p140 = scmp.ne.s32.totalorder %s125, %s139
      %p141 = scmp.eq.s32.totalorder %s26, 0
      %p142 = por %p140, %p141
      %s144 = sadd.s32 %s143, 1
      %p147 = scmp.eq.s32.totalorder %s20, 1
      %p148 = scmp.ne.s32.totalorder %s143, %s145
      %p149 = scmp.eq.s32.totalorder %s20, 0
      %p150 = por %p148, %p149
      %p151 = scmp.ne.s32.totalorder %s143, %s145
      %p152 = scmp.eq.s32.totalorder %s25, 1
      %p153 = por %p151, %p152
      %p154 = scmp.ne.s32.totalorder %s145, %s146
      %p155 = scmp.eq.s32.totalorder %s25, 0
      %p156 = por %p154, %p155
      %p157 = scmp.ne.s32.totalorder %s145, %s146
      %p158 = scmp.eq.s32.totalorder %s26, 1
      %p159 = por %p157, %p158
      %p161 = scmp.ne.s32.totalorder %s146, %s160
      %p162 = scmp.eq.s32.totalorder %s26, 0
      %p163 = por %p161, %p162
      %s165 = sadd.s32 %s164, 1
      %p168 = scmp.eq.s32.totalorder %s20, 1
      %p169 = scmp.ne.s32.totalorder %s164, %s166
      %p170 = scmp.eq.s32.totalorder %s20, 0
      %p171 = por %p169, %p170
      %p172 = scmp.ne.s32.totalorder %s164, %s166
      %p173 = scmp.eq.s32.totalorder %s25, 1
      %p174 = por %p172, %p173
      %p175 = scmp.ne.s32.totalorder %s166, %s167
      %p176 = scmp.eq.s32.totalorder %s25, 0
      %p177 = por %p175, %p176
      %p178 = scmp.ne.s32.totalorder %s166, %s167
      %p179 = scmp.eq.s32.totalorder %s26, 1
      %p180 = por %p178, %p179
      %p182 = scmp.ne.s32.totalorder %s167, %s181
      %p183 = scmp.eq.s32.totalorder %s26, 0
      %p184 = por %p182, %p183
      %s186 = sadd.s32 %s185, 1
      %p189 = scmp.eq.s32.totalorder %s20, 1
      %p190 = scmp.ne.s32.totalorder %s185, %s187
      %p191 = scmp.eq.s32.totalorder %s20, 0
      %p192 = por %p190, %p191
      %p193 = scmp.ne.s32.totalorder %s185, %s187
      %p194 = scmp.eq.s32.totalorder %s25, 1
      %p195 = por %p193, %p194
      %p196 = scmp.ne.s32.totalorder %s187, %s188
      %p197 = scmp.eq.s32.totalorder %s25, 0
      %p198 = por %p196, %p197
      %p199 = scmp.ne.s32.totalorder %s187, %s188
      %p200 = scmp.eq.s32.totalorder %s26, 1
      %p201 = por %p199, %p200
      %p203 = scmp.ne.s32.totalorder %s188, %s202
      %p204 = scmp.eq.s32.totalorder %s26, 0
      %p205 = por %p203, %p204
      %s207 = sadd.s32 %s206, 1
      %p210 = scmp.eq.s32.totalorder %s20, 1
      %p211 = scmp.ne.s32.totalorder %s206, %s208
      %p212 = scmp.eq.s32.totalorder %s20, 0
      %p213 = por %p211, %p212
      %p214 = scmp.ne.s32.totalorder %s206, %s208
      %p215 = scmp.eq.s32.totalorder %s25, 1
      %p216 = por %p214, %p215
      %p217 = scmp.ne.s32.totalorder %s208, %s209
      %p218 = scmp.eq.s32.totalorder %s25, 0
      %p219 = por %p217, %p218
      %p220 = scmp.ne.s32.totalorder %s208, %s209
      %p221 = scmp.eq.s32.totalorder %s26, 1
      %p222 = por %p220, %p221
      %p224 = scmp.ne.s32.totalorder %s209, %s223
      %p225 = scmp.eq.s32.totalorder %s26, 0
      %p226 = por %p224, %p225
      %s228 = sadd.s32 %s227, 1
      %p231 = scmp.eq.s32.totalorder %s20, 1
      %p232 = scmp.ne.s32.totalorder %s227, %s229
      %p233 = scmp.eq.s32.totalorder %s20, 0
      %p234 = por %p232, %p233
      %p235 = scmp.ne.s32.totalorder %s227, %s229
      %p236 = scmp.eq.s32.totalorder %s25, 1
      %p237 = por %p235, %p236
      %p238 = scmp.ne.s32.totalorder %s229, %s230
      %p239 = scmp.eq.s32.totalorder %s25, 0
      %p240 = por %p238, %p239
      %p241 = scmp.ne.s32.totalorder %s229, %s230
      %p242 = scmp.eq.s32.totalorder %s26, 1
      %p243 = por %p241, %p242
      %p245 = scmp.ne.s32.totalorder %s230, %s244
      %p246 = scmp.eq.s32.totalorder %s26, 0
      %p247 = por %p245, %p246
      %s249 = sadd.s32 %s248, 1
      %p252 = scmp.eq.s32.totalorder %s20, 1
      %p253 = scmp.ne.s32.totalorder %s248, %s250
      %p254 = scmp.eq.s32.totalorder %s20, 0
      %p255 = por %p253, %p254
      %p256 = scmp.ne.s32.totalorder %s248, %s250
      %p257 = scmp.eq.s32.totalorder %s25, 1
      %p258 = por %p256, %p257
      %p259 = scmp.ne.s32.totalorder %s250, %s251
      %p260 = scmp.eq.s32.totalorder %s25, 0
      %p261 = por %p259, %p260
      %p262 = scmp.ne.s32.totalorder %s250, %s251
      %p263 = scmp.eq.s32.totalorder %s26, 1
      %p264 = por %p262, %p263
      %p266 = scmp.ne.s32.totalorder %s251, %s265
      %p267 = scmp.eq.s32.totalorder %s26, 0
      %p268 = por %p266, %p267
      %s270 = sadd.s32 %s269, 1
      %p273 = scmp.eq.s32.totalorder %s20, 1
      %p274 = scmp.ne.s32.totalorder %s269, %s271
      %p275 = scmp.eq.s32.totalorder %s20, 0
      %p276 = por %p274, %p275
      %p277 = scmp.ne.s32.totalorder %s269, %s271
      %p278 = scmp.eq.s32.totalorder %s25, 1
      %p279 = por %p277, %p278
      %p280 = scmp.ne.s32.totalorder %s271, %s272
      %p281 = scmp.eq.s32.totalorder %s25, 0
      %p282 = por %p280, %p281
      %p283 = scmp.ne.s32.totalorder %s271, %s272
      %p284 = scmp.eq.s32.totalorder %s26, 1
      %p285 = por %p283, %p284
      %p287 = scmp.ne.s32.totalorder %s272, %s286
      %p288 = scmp.eq.s32.totalorder %s26, 0
      %p289 = por %p287, %p288
      %s290 = ssub.s32 %s20, %s27
      %p291 = scmp.eq.s32.totalorder %s290, 0
      %s293 = sadd.s32 %s292, 1
      %s294 = scalar_select %p291, %s292, %s293
      %p297 = pneg %p291
      %p298 = scmp.eq.s32.totalorder %s20, 1
      %p299 = por %p297, %p298
      %p300 = scmp.ne.s32.totalorder %s292, %s295
      %p301 = scmp.eq.s32.totalorder %s20, 0
      %p302 = por %p300, %p301
      %p303 = scmp.ne.s32.totalorder %s292, %s295
      %p304 = scmp.eq.s32.totalorder %s25, 1
      %p305 = por %p303, %p304
      %p306 = scmp.ne.s32.totalorder %s295, %s296
      %p307 = scmp.eq.s32.totalorder %s25, 0
      %p308 = por %p306, %p307
      %p309 = scmp.ne.s32.totalorder %s295, %s296
      %p310 = scmp.eq.s32.totalorder %s26, 1
      %p311 = por %p309, %p310
      %p313 = scmp.ne.s32.totalorder %s296, %s312
      %p314 = scmp.eq.s32.totalorder %s26, 0
      %p315 = por %p313, %p314
      %p316 = scmp.le.s32.totalorder 1, %s20
      %p317 = scmp.lt.s32.totalorder %s20, 3
      %p318 = pnand %p316, %p317
      %p319 = pneg %p318
      // Predicated region
      $region9: #{encoder_forward.1} parent=5 // pred_check
        _
      $region10: #{encoder_forward.1} parent=5 // pred_check_branch
        %321 = sbr.rel (%p318) target = $region12
      $region11: #{encoder_forward.1} parent=5 // pred_region
        %s322 = ssub.s32 %s20, 1
        // Predicated region
        $region13: #{encoder_forward.1} parent=11 // pred_check
          %p323 = pneg %p93
        $region14: #{encoder_forward.1} parent=11 // pred_check_branch
          %325 = sbr.rel (%p323) target = $region16
        $region15: #{encoder_forward.1} parent=11 // pred_region
          %s327 = ssub.s32 6144, 6144
          %328 = vsyncadd [#allocation4], %s327
          %s329 = sshll.u32 [#allocation3], 4
          %s330 = int_to_ptr.vmem [resolvable:$true] %s329
          %335 = dma.hbm_to_vmem [thread:$0]  %s2, 6144, %s330, [#allocation4], 384, 384, 24
        $region16: #{encoder_forward.1} parent=11 // pred_fallthru
          _
        // Predicated region
        $region17: #{encoder_forward.1} parent=11 // pred_check
          %p336 = pneg %p114
        $region18: #{encoder_forward.1} parent=11 // pred_check_branch
          %338 = sbr.rel (%p336) target = $region20
        $region19: #{encoder_forward.1} parent=11 // pred_region
          %s340 = ssub.s32 2048, 2048
          %341 = vsyncadd [#allocation6], %s340
          %s342 = sshll.u32 [#allocation5], 4
          %s343 = int_to_ptr.vmem [resolvable:$true] %s342
          %348 = dma.hbm_to_vmem [thread:$0]  %s3, 2048, %s343, [#allocation6], 64, 64, 4
        $region20: #{encoder_forward.1} parent=11 // pred_fallthru
          _
        // Predicated region
        $region21: #{encoder_forward.1} parent=11 // pred_check
          %p349 = pneg %p135
        $region22: #{encoder_forward.1} parent=11 // pred_check_branch
          %351 = sbr.rel (%p349) target = $region24
        $region23: #{encoder_forward.1} parent=11 // pred_region
          _
        $region24: #{encoder_forward.1} parent=11 // pred_fallthru
          _
        // Predicated region
        $region25: #{encoder_forward.1} parent=11 // pred_check
          %p352 = pneg %p156
        $region26: #{encoder_forward.1} parent=11 // pred_check_branch
          %354 = sbr.rel (%p352) target = $region28
        $region27: #{encoder_forward.1} parent=11 // pred_region
          _
        $region28: #{encoder_forward.1} parent=11 // pred_fallthru
          _
        // Predicated region
        $region29: #{encoder_forward.1} parent=11 // pred_check
          %p355 = pneg %p177
        $region30: #{encoder_forward.1} parent=11 // pred_check_branch
          %357 = sbr.rel (%p355) target = $region32
        $region31: #{encoder_forward.1} parent=11 // pred_region
          _
        $region32: #{encoder_forward.1} parent=11 // pred_fallthru
          _
        // Predicated region
        $region33: #{encoder_forward.1} parent=11 // pred_check
          %p358 = pneg %p198
        $region34: #{encoder_forward.1} parent=11 // pred_check_branch
          %360 = sbr.rel (%p358) target = $region36
        $region35: #{encoder_forward.1} parent=11 // pred_region
          _
        $region36: #{encoder_forward.1} parent=11 // pred_fallthru
          _
        // Predicated region
        $region37: #{encoder_forward.1} parent=11 // pred_check
          %p361 = pneg %p219
        $region38: #{encoder_forward.1} parent=11 // pred_check_branch
          %363 = sbr.rel (%p361) target = $region40
        $region39: #{encoder_forward.1} parent=11 // pred_region
          %s365 = ssub.s32 1024, 1024
          %366 = vsyncadd [#allocation6], %s365
          %s367 = sshll.u32 [#allocation7], 4
          %s368 = int_to_ptr.vmem [resolvable:$true] %s367
          %373 = dma.hbm_to_vmem [thread:$0]  %s8, 1024, %s368, [#allocation6], 64, 64, 4
        $region40: #{encoder_forward.1} parent=11 // pred_fallthru
          _
        // Predicated region
        $region41: #{encoder_forward.1} parent=11 // pred_check
          %p374 = pneg %p240
        $region42: #{encoder_forward.1} parent=11 // pred_check_branch
          %376 = sbr.rel (%p374) target = $region44
        $region43: #{encoder_forward.1} parent=11 // pred_region
          _
        $region44: #{encoder_forward.1} parent=11 // pred_fallthru
          _
        // Predicated region
        $region45: #{encoder_forward.1} parent=11 // pred_check
          %p377 = pneg %p261
        $region46: #{encoder_forward.1} parent=11 // pred_check_branch
          %379 = sbr.rel (%p377) target = $region48
        $region47: #{encoder_forward.1} parent=11 // pred_region
          _
        $region48: #{encoder_forward.1} parent=11 // pred_fallthru
          _
        // Predicated region
        $region49: #{encoder_forward.1} parent=11 // pred_check
          %p380 = pneg %p282
        $region50: #{encoder_forward.1} parent=11 // pred_check_branch
          %382 = sbr.rel (%p380) target = $region52
        $region51: #{encoder_forward.1} parent=11 // pred_region
          _
        $region52: #{encoder_forward.1} parent=11 // pred_fallthru
          _
      $region12: #{encoder_forward.1} parent=5 // pred_fallthru
        _
      %p383 = scmp.lt.s32.totalorder %s20, 2
      // Predicated region
      $region53: #{encoder_forward.1} parent=5 // pred_check
        %p384 = pneg %p383
      $region54: #{encoder_forward.1} parent=5 // pred_check_branch
        %386 = sbr.rel (%p384) target = $region56
      $region55: #{encoder_forward.1} parent=5 // pred_region
        // Predicated region
        $region57: #{encoder_forward.1} parent=55 // pred_check
          %p387 = pneg %p40
        $region58: #{encoder_forward.1} parent=55 // pred_check_branch
          %389 = sbr.rel (%p387) target = $region60
        $region59: #{encoder_forward.1} parent=55 // pred_region
          %p390 = scmp.lt.s32.totalorder %s20, 1
          %s391 = scalar_select %p390, %s20, 1
          %s392 = smul.addr %s391, 2
          %s393 = smul.addr %s392, 4
          %s394 = scalar_lea.vmem %s0, %s393
        $region60: #{encoder_forward.1} parent=55 // pred_fallthru
          _
        // Predicated region
        $region61: #{encoder_forward.1} parent=55 // pred_check
          %p395 = pneg %p66
        $region62: #{encoder_forward.1} parent=55 // pred_check_branch
          %397 = sbr.rel (%p395) target = $region64
        $region63: #{encoder_forward.1} parent=55 // pred_region
          %p398 = scmp.lt.s32.totalorder %s20, 1
          %s399 = scalar_select %p398, %s20, 1
          %s400 = scalar_lea.vmem %s1, %s399
        $region64: #{encoder_forward.1} parent=55 // pred_fallthru
          _
      $region56: #{encoder_forward.1} parent=5 // pred_fallthru
        _
      %p401 = scmp.le.s32.totalorder 1, %s20
      %p402 = scmp.lt.s32.totalorder %s20, 3
      %p403 = pnand %p401, %p402
      %p404 = pneg %p403
      // Predicated region
      $region65: #{encoder_forward.1} parent=5 // pred_check
        _
      $region66: #{encoder_forward.1} parent=5 // pred_check_branch
        %406 = sbr.rel (%p403) target = $region68
      $region67: #{encoder_forward.1} parent=5 // pred_region
        %s407 = ssub.s32 %s20, 1
        // Predicated region
        $region69: #{encoder_forward.1} parent=67 // pred_check
          %p408 = pneg %p93
        $region70: #{encoder_forward.1} parent=67 // pred_check_branch
          %410 = sbr.rel (%p408) target = $region72
        $region71: #{encoder_forward.1} parent=67 // pred_region
          %411 = dma.done [#allocation4], 6144
        $region72: #{encoder_forward.1} parent=67 // pred_fallthru
          _
        // Predicated region
        $region73: #{encoder_forward.1} parent=67 // pred_check
          %p412 = pneg %p114
        $region74: #{encoder_forward.1} parent=67 // pred_check_branch
          %414 = sbr.rel (%p412) target = $region76
        $region75: #{encoder_forward.1} parent=67 // pred_region
          %415 = dma.done [#allocation6], 2048
        $region76: #{encoder_forward.1} parent=67 // pred_fallthru
          _
        // Predicated region
        $region77: #{encoder_forward.1} parent=67 // pred_check
          %p416 = pneg %p219
        $region78: #{encoder_forward.1} parent=67 // pred_check_branch
          %418 = sbr.rel (%p416) target = $region80
        $region79: #{encoder_forward.1} parent=67 // pred_region
          %419 = dma.done [#allocation6], 1024
        $region80: #{encoder_forward.1} parent=67 // pred_fallthru
          _
        %p420 = scmp.lt.s32.totalorder %s25, 1
        %s421 = scalar_select %p420, %s25, 1
        %s422 = smul.addr %s421, 2
        %s423 = smul.addr %s422, 4
        %s424 = scalar_lea.vmem %s0, %s423
        %p425 = pneg %p46
        %p426 = pneg %p43
        %p427 = scmp.lt.s32.totalorder %s25, 1
        %s428 = scalar_select %p427, %s25, 1
        %s429 = scalar_lea.vmem %s1, %s428
        %p430 = pneg %p72
        %p431 = pneg %p69
        %p432 = pneg %p93
        %p433 = pneg %p90
        %p434 = pneg %p114
        %p435 = pneg %p111
        %p436 = pneg %p135
        %p437 = pneg %p132
        %p438 = pneg %p156
        %p439 = pneg %p153
        %p440 = pneg %p177
        %p441 = pneg %p174
        %p442 = pneg %p198
        %p443 = pneg %p195
        %p444 = pneg %p219
        %p445 = pneg %p216
        %p446 = pneg %p240
        %p447 = pneg %p237
        %p448 = pneg %p261
        %p449 = pneg %p258
        %p450 = pneg %p282
        %p451 = pneg %p279
        %p452 = pneg %p308
        %p453 = pneg %p305
        %p454 = scmp.lt.s32.totalorder %s25, 1
        %s455 = scalar_select %p454, %s25, 1
        %s456 = smul.addr %s455, 2
        %s457 = smul.addr %s456, 4
        %s458 = scalar_lea.vmem %s12, %s457
        %p459 = scmp.lt.s32.totalorder %s25, 1
        %s460 = scalar_select %p459, %s25, 1
        %s461 = smul.addr %s460, 2
        %s462 = smul.addr %s461, 4
        %s463 = scalar_lea.vmem %s0, %s462
        %p464 = scmp.lt.s32.totalorder %s25, 1
        %s465 = scalar_select %p464, %s25, 1
        %s466 = scalar_lea.vmem %s1, %s465
        %p467 = scmp.lt.s32.totalorder %s25, 1
        %s468 = scalar_select %p467, %s25, 1
        %s469 = smul.addr %s468, 2
        %s470 = smul.addr %s469, 4
        %s471 = scalar_lea.vmem %s12, %s470
        %v473 = vld [vmem:[%s463] sm:$0xf]
        %v474 = vld [vmem:[%s463 + $0x4] sm:$0xf]
        %v475 = vld [vmem:[%s466] sm:$0x1]
        %v476 = vlaneseq
        %v477 = vand.u32 %v476, 127
        %vm478 = vcmp.lt.s32.totalorder %v477, 32
        %v479 = vsel %vm478, 1, 0
        %v480 = vcvt.s32.f32 %v479
        %v481 = vld [vmem:[#allocation3] sm:$0xff]
        %v482 = vld [vmem:[#allocation3 + $0x8] sm:$0xff]
        %v483 = vld [vmem:[#allocation3 + $0x10] sm:$0xff]
        %v484 = vld [vmem:[#allocation3 + $0x18] sm:$0xff]
        %v485 = vld [vmem:[#allocation3 + $0x20] sm:$0xff]
        %v486 = vld [vmem:[#allocation3 + $0x28] sm:$0xff]
        %v487 = vld [vmem:[#allocation3 + $0x30] sm:$0xff]
        %v488 = vld [vmem:[#allocation3 + $0x38] sm:$0xff]
        %v489 = vld [vmem:[#allocation3 + $0x40] sm:$0xff]
        %v490 = vld [vmem:[#allocation3 + $0x48] sm:$0xff]
        %v491 = vld [vmem:[#allocation3 + $0x50] sm:$0xff]
        %v492 = vld [vmem:[#allocation3 + $0x58] sm:$0xff]
        %v493 = vld [vmem:[#allocation3 + $0x60] sm:$0xff]
        %v494 = vld [vmem:[#allocation3 + $0x68] sm:$0xff]
        %v495 = vld [vmem:[#allocation3 + $0x70] sm:$0xff]
        %v496 = vld [vmem:[#allocation3 + $0x78] sm:$0xff]
        %v497 = vld [vmem:[#allocation3 + $0x80] sm:$0xff]
        %v498 = vld [vmem:[#allocation3 + $0x88] sm:$0xff]
        %v499 = vld [vmem:[#allocation3 + $0x90] sm:$0xff]
        %v500 = vld [vmem:[#allocation3 + $0x98] sm:$0xff]
        %v501 = vld [vmem:[#allocation3 + $0xa0] sm:$0xff]
        %v502 = vld [vmem:[#allocation3 + $0xa8] sm:$0xff]
        %v503 = vld [vmem:[#allocation3 + $0xb0] sm:$0xff]
        %v504 = vld [vmem:[#allocation3 + $0xb8] sm:$0xff]
        %v505 = vld [vmem:[#allocation3 + $0xc0] sm:$0xff]
        %v506 = vld [vmem:[#allocation3 + $0xc8] sm:$0xff]
        %v507 = vld [vmem:[#allocation3 + $0xd0] sm:$0xff]
        %v508 = vld [vmem:[#allocation3 + $0xd8] sm:$0xff]
        %v509 = vld [vmem:[#allocation3 + $0xe0] sm:$0xff]
        %v510 = vld [vmem:[#allocation3 + $0xe8] sm:$0xff]
        %v511 = vld [vmem:[#allocation3 + $0xf0] sm:$0xff]
        %v512 = vld [vmem:[#allocation3 + $0xf8] sm:$0xff]
        %v513 = vld [vmem:[#allocation3 + $0x100] sm:$0xff]
        %v514 = vld [vmem:[#allocation3 + $0x108] sm:$0xff]
        %v515 = vld [vmem:[#allocation3 + $0x110] sm:$0xff]
        %v516 = vld [vmem:[#allocation3 + $0x118] sm:$0xff]
        %v517 = vld [vmem:[#allocation3 + $0x120] sm:$0xff]
        %v518 = vld [vmem:[#allocation3 + $0x128] sm:$0xff]
        %v519 = vld [vmem:[#allocation3 + $0x130] sm:$0xff]
        %v520 = vld [vmem:[#allocation3 + $0x138] sm:$0xff]
        %v521 = vld [vmem:[#allocation3 + $0x140] sm:$0xff]
        %v522 = vld [vmem:[#allocation3 + $0x148] sm:$0xff]
        %v523 = vld [vmem:[#allocation3 + $0x150] sm:$0xff]
        %v524 = vld [vmem:[#allocation3 + $0x158] sm:$0xff]
        %v525 = vld [vmem:[#allocation3 + $0x160] sm:$0xff]
        %v526 = vld [vmem:[#allocation3 + $0x168] sm:$0xff]
        %v527 = vld [vmem:[#allocation3 + $0x170] sm:$0xff]
        %v528 = vld [vmem:[#allocation3 + $0x178] sm:$0xff]
        %v531 = vunpack.c.l.b16 %v473
        %v532 = vunpack.c.l.b16 %v474
        %v533 = vpack.c.b16 %v532, %v531
        %v583 = vunpack.c.l.b16 %v481
        %v584 = vunpack.c.h.b16 %v481
        %v585 = vunpack.c.l.b16 %v482
        %v586 = vunpack.c.h.b16 %v482
        %v587 = vunpack.c.l.b16 %v483
        %v588 = vunpack.c.h.b16 %v483
        %v589 = vunpack.c.l.b16 %v484
        %v590 = vunpack.c.h.b16 %v484
        %v591 = vunpack.c.l.b16 %v485
        %v592 = vunpack.c.h.b16 %v485
        %v593 = vunpack.c.l.b16 %v486
        %v594 = vunpack.c.h.b16 %v486
        %v595 = vunpack.c.l.b16 %v487
        %v596 = vunpack.c.h.b16 %v487
        %v597 = vunpack.c.l.b16 %v488
        %v598 = vunpack.c.h.b16 %v488
        %v599 = vunpack.c.l.b16 %v489
        %v600 = vunpack.c.h.b16 %v489
        %v601 = vunpack.c.l.b16 %v490
        %v602 = vunpack.c.h.b16 %v490
        %v603 = vunpack.c.l.b16 %v491
        %v604 = vunpack.c.h.b16 %v491
        %v605 = vunpack.c.l.b16 %v492
        %v606 = vunpack.c.h.b16 %v492
        %v607 = vunpack.c.l.b16 %v493
        %v608 = vunpack.c.h.b16 %v493
        %v609 = vunpack.c.l.b16 %v494
        %v610 = vunpack.c.h.b16 %v494
        %v611 = vunpack.c.l.b16 %v495
        %v612 = vunpack.c.h.b16 %v495
        %v613 = vunpack.c.l.b16 %v496
        %v614 = vunpack.c.h.b16 %v496
        %v615 = vunpack.c.l.b16 %v497
        %v616 = vunpack.c.h.b16 %v497
        %v617 = vunpack.c.l.b16 %v498
        %v618 = vunpack.c.h.b16 %v498
        %v619 = vunpack.c.l.b16 %v499
        %v620 = vunpack.c.h.b16 %v499
        %v621 = vunpack.c.l.b16 %v500
        %v622 = vunpack.c.h.b16 %v500
        %v623 = vunpack.c.l.b16 %v501
        %v624 = vunpack.c.h.b16 %v501
        %v625 = vunpack.c.l.b16 %v502
        %v626 = vunpack.c.h.b16 %v502
        %v627 = vunpack.c.l.b16 %v503
        %v628 = vunpack.c.h.b16 %v503
        %v629 = vunpack.c.l.b16 %v504
        %v630 = vunpack.c.h.b16 %v504
        %v631 = vunpack.c.l.b16 %v505
        %v632 = vunpack.c.h.b16 %v505
        %v633 = vunpack.c.l.b16 %v506
        %v634 = vunpack.c.h.b16 %v506
        %v635 = vunpack.c.l.b16 %v507
        %v636 = vunpack.c.h.b16 %v507
        %v637 = vunpack.c.l.b16 %v508
        %v638 = vunpack.c.h.b16 %v508
        %v639 = vunpack.c.l.b16 %v509
        %v640 = vunpack.c.h.b16 %v509
        %v641 = vunpack.c.l.b16 %v510
        %v642 = vunpack.c.h.b16 %v510
        %v643 = vunpack.c.l.b16 %v511
        %v644 = vunpack.c.h.b16 %v511
        %v645 = vunpack.c.l.b16 %v512
        %v646 = vunpack.c.h.b16 %v512
        %v647 = vunpack.c.l.b16 %v513
        %v648 = vunpack.c.h.b16 %v513
        %v649 = vunpack.c.l.b16 %v514
        %v650 = vunpack.c.h.b16 %v514
        %v651 = vunpack.c.l.b16 %v515
        %v652 = vunpack.c.h.b16 %v515
        %v653 = vunpack.c.l.b16 %v516
        %v654 = vunpack.c.h.b16 %v516
        %v655 = vunpack.c.l.b16 %v517
        %v656 = vunpack.c.h.b16 %v517
        %v657 = vunpack.c.l.b16 %v518
        %v658 = vunpack.c.h.b16 %v518
        %v659 = vunpack.c.l.b16 %v519
        %v660 = vunpack.c.h.b16 %v519
        %v661 = vunpack.c.l.b16 %v520
        %v662 = vunpack.c.h.b16 %v520
        %v663 = vunpack.c.l.b16 %v521
        %v664 = vunpack.c.h.b16 %v521
        %v665 = vunpack.c.l.b16 %v522
        %v666 = vunpack.c.h.b16 %v522
        %v667 = vunpack.c.l.b16 %v523
        %v668 = vunpack.c.h.b16 %v523
        %v669 = vunpack.c.l.b16 %v524
        %v670 = vunpack.c.h.b16 %v524
        %v671 = vunpack.c.l.b16 %v525
        %v672 = vunpack.c.h.b16 %v525
        %v673 = vunpack.c.l.b16 %v526
        %v674 = vunpack.c.h.b16 %v526
        %v675 = vunpack.c.l.b16 %v527
        %v676 = vunpack.c.h.b16 %v527
        %v677 = vunpack.c.l.b16 %v528
        %v678 = vunpack.c.h.b16 %v528
        %v679 = vpack.c.b16 %v589, %v583
        %v680 = vpack.c.b16 %v590, %v584
        %v681 = vpack.c.b16 %v591, %v585
        %v682 = vpack.c.b16 %v592, %v586
        %v683 = vpack.c.b16 %v593, %v587
        %v684 = vpack.c.b16 %v594, %v588
        %v685 = vpack.c.b16 %v601, %v595
        %v686 = vpack.c.b16 %v602, %v596
        %v687 = vpack.c.b16 %v603, %v597
        %v688 = vpack.c.b16 %v604, %v598
        %v689 = vpack.c.b16 %v605, %v599
        %v690 = vpack.c.b16 %v606, %v600
        %v691 = vpack.c.b16 %v613, %v607
        %v692 = vpack.c.b16 %v614, %v608
        %v693 = vpack.c.b16 %v615, %v609
        %v694 = vpack.c.b16 %v616, %v610
        %v695 = vpack.c.b16 %v617, %v611
        %v696 = vpack.c.b16 %v618, %v612
        %v697 = vpack.c.b16 %v625, %v619
        %v698 = vpack.c.b16 %v626, %v620
        %v699 = vpack.c.b16 %v627, %v621
        %v700 = vpack.c.b16 %v628, %v622
        %v701 = vpack.c.b16 %v629, %v623
        %v702 = vpack.c.b16 %v630, %v624
        %v703 = vpack.c.b16 %v637, %v631
        %v704 = vpack.c.b16 %v638, %v632
        %v705 = vpack.c.b16 %v639, %v633
        %v706 = vpack.c.b16 %v640, %v634
        %v707 = vpack.c.b16 %v641, %v635
        %v708 = vpack.c.b16 %v642, %v636
        %v709 = vpack.c.b16 %v649, %v643
        %v710 = vpack.c.b16 %v650, %v644
        %v711 = vpack.c.b16 %v651, %v645
        %v712 = vpack.c.b16 %v652, %v646
        %v713 = vpack.c.b16 %v653, %v647
        %v714 = vpack.c.b16 %v654, %v648
        %v715 = vpack.c.b16 %v661, %v655
        %v716 = vpack.c.b16 %v662, %v656
        %v717 = vpack.c.b16 %v663, %v657
        %v718 = vpack.c.b16 %v664, %v658
        %v719 = vpack.c.b16 %v665, %v659
        %v720 = vpack.c.b16 %v666, %v660
        %v721 = vpack.c.b16 %v673, %v667
        %v722 = vpack.c.b16 %v674, %v668
        %v723 = vpack.c.b16 %v675, %v669
        %v724 = vpack.c.b16 %v676, %v670
        %v725 = vpack.c.b16 %v677, %v671
        %v726 = vpack.c.b16 %v678, %v672
        %775 = vmatprep.subr.bf16.mxu0 %v680
        %776 = vmatpush1.bf16.msra.mxu0 %v679
        %777 = vmatprep.subr.bf16.mxu0 %v686
        %778 = vmatpush1.bf16.msra.mxu0 %v685
        %779 = vmatprep.subr.bf16.mxu0 %v692
        %780 = vmatpush1.bf16.msra.mxu0 %v691
        %781 = vmatprep.subr.bf16.mxu0 %v698
        %782 = vmatpush1.bf16.msra.mxu0 %v697
        %783 = vmatprep.subr.bf16.mxu0 %v704
        %784 = vmatpush1.bf16.msra.mxu0 %v703
        %785 = vmatprep.subr.bf16.mxu0 %v710
        %786 = vmatpush1.bf16.msra.mxu0 %v709
        %787 = vmatprep.subr.bf16.mxu0 %v716
        %788 = vmatpush1.bf16.msra.mxu0 %v715
        %789 = vmatprep.subr.bf16.mxu0 %v722
        %790 = vmatpush1.bf16.msra.mxu0 %v721
        %791 = vmatprep.subr.bf16.mxu0 0
        %792 = vmatpush1.bf16.msra.mxu0 0
        %793 = vmatprep.subr.bf16.mxu0 0
        %794 = vmatpush1.bf16.msra.mxu0 0
        %795 = vmatprep.subr.bf16.mxu0 0
        %796 = vmatpush1.bf16.msra.mxu0 0
        %797 = vmatprep.subr.bf16.mxu0 0
        %798 = vmatpush1.bf16.msra.mxu0 0
        %799 = vmatprep.subr.bf16.mxu0 0
        %800 = vmatpush1.bf16.msra.mxu0 0
        %801 = vmatprep.subr.bf16.mxu0 0
        %802 = vmatpush1.bf16.msra.mxu0 0
        %803 = vmatprep.subr.bf16.mxu0 0
        %804 = vmatpush1.bf16.msra.mxu0 0
        %805 = vmatprep.subr.bf16.mxu0 0
        %806 = vmatpush1.bf16.msra.mxu0 0
        %807 = vmatprep.mubr.bf16.mxu0 0
        %808 = vmatmul.mubr.bf16.gmra.mrb[0].mxu0 %v533
        %v809 = vpop.f32.mrb[0].mxu0
        %v810 = vadd.f32 0.0, %v809
        %v811 = vpop.f32.mrb[0].mxu0
        %v812 = vadd.f32 0.0, %v811
        %v813 = vpop.f32.mrb[0].mxu0
        %v814 = vadd.f32 0.0, %v813
        %v815 = vpop.f32.mrb[0].mxu0
        %v816 = vadd.f32 0.0, %v815
        %817 = vdwg.mxu0
        %818 = vmatprep.subr.bf16.mxu0 %v682
        %819 = vmatpush1.bf16.msra.mxu0 %v681
        %820 = vmatprep.subr.bf16.mxu0 %v688
        %821 = vmatpush1.bf16.msra.mxu0 %v687
        %822 = vmatprep.subr.bf16.mxu0 %v694
        %823 = vmatpush1.bf16.msra.mxu0 %v693
        %824 = vmatprep.subr.bf16.mxu0 %v700
        %825 = vmatpush1.bf16.msra.mxu0 %v699
        %826 = vmatprep.subr.bf16.mxu0 %v706
        %827 = vmatpush1.bf16.msra.mxu0 %v705
        %828 = vmatprep.subr.bf16.mxu0 %v712
        %829 = vmatpush1.bf16.msra.mxu0 %v711
        %830 = vmatprep.subr.bf16.mxu0 %v718
        %831 = vmatpush1.bf16.msra.mxu0 %v717
        %832 = vmatprep.subr.bf16.mxu0 %v724
        %833 = vmatpush1.bf16.msra.mxu0 %v723
        %834 = vmatprep.subr.bf16.mxu0 0
        %835 = vmatpush1.bf16.msra.mxu0 0
        %836 = vmatprep.subr.bf16.mxu0 0
        %837 = vmatpush1.bf16.msra.mxu0 0
        %838 = vmatprep.subr.bf16.mxu0 0
        %839 = vmatpush1.bf16.msra.mxu0 0
        %840 = vmatprep.subr.bf16.mxu0 0
        %841 = vmatpush1.bf16.msra.mxu0 0
        %842 = vmatprep.subr.bf16.mxu0 0
        %843 = vmatpush1.bf16.msra.mxu0 0
        %844 = vmatprep.subr.bf16.mxu0 0
        %845 = vmatpush1.bf16.msra.mxu0 0
        %846 = vmatprep.subr.bf16.mxu0 0
        %847 = vmatpush1.bf16.msra.mxu0 0
        %848 = vmatprep.subr.bf16.mxu0 0
        %849 = vmatpush1.bf16.msra.mxu0 0
        %850 = vmatprep.mubr.bf16.mxu0 0
        %851 = vmatmul.mubr.bf16.gmra.mrb[0].mxu0 %v533
        %v852 = vpop.f32.mrb[0].mxu0
        %v853 = vadd.f32 0.0, %v852
        %v854 = vpop.f32.mrb[0].mxu0
        %v855 = vadd.f32 0.0, %v854
        %v856 = vpop.f32.mrb[0].mxu0
        %v857 = vadd.f32 0.0, %v856
        %v858 = vpop.f32.mrb[0].mxu0
        %v859 = vadd.f32 0.0, %v858
        %860 = vdwg.mxu0
        %861 = vmatprep.subr.bf16.mxu0 %v684
        %862 = vmatpush1.bf16.msra.mxu0 %v683
        %863 = vmatprep.subr.bf16.mxu0 %v690
        %864 = vmatpush1.bf16.msra.mxu0 %v689
        %865 = vmatprep.subr.bf16.mxu0 %v696
        %866 = vmatpush1.bf16.msra.mxu0 %v695
        %867 = vmatprep.subr.bf16.mxu0 %v702
        %868 = vmatpush1.bf16.msra.mxu0 %v701
        %869 = vmatprep.subr.bf16.mxu0 %v708
        %870 = vmatpush1.bf16.msra.mxu0 %v707
        %871 = vmatprep.subr.bf16.mxu0 %v714
        %872 = vmatpush1.bf16.msra.mxu0 %v713
        %873 = vmatprep.subr.bf16.mxu0 %v720
        %874 = vmatpush1.bf16.msra.mxu0 %v719
        %875 = vmatprep.subr.bf16.mxu0 %v726
        %876 = vmatpush1.bf16.msra.mxu0 %v725
        %877 = vmatprep.subr.bf16.mxu0 0
        %878 = vmatpush1.bf16.msra.mxu0 0
        %879 = vmatprep.subr.bf16.mxu0 0
        %880 = vmatpush1.bf16.msra.mxu0 0
        %881 = vmatprep.subr.bf16.mxu0 0
        %882 = vmatpush1.bf16.msra.mxu0 0
        %883 = vmatprep.subr.bf16.mxu0 0
        %884 = vmatpush1.bf16.msra.mxu0 0
        %885 = vmatprep.subr.bf16.mxu0 0
        %886 = vmatpush1.bf16.msra.mxu0 0
        %887 = vmatprep.subr.bf16.mxu0 0
        %888 = vmatpush1.bf16.msra.mxu0 0
        %889 = vmatprep.subr.bf16.mxu0 0
        %890 = vmatpush1.bf16.msra.mxu0 0
        %891 = vmatprep.subr.bf16.mxu0 0
        %892 = vmatpush1.bf16.msra.mxu0 0
        %893 = vmatprep.mubr.bf16.mxu0 0
        %894 = vmatmul.mubr.bf16.gmra.mrb[0].mxu0 %v533
        %v895 = vpop.f32.mrb[0].mxu0
        %v896 = vadd.f32 0.0, %v895
        %v897 = vpop.f32.mrb[0].mxu0
        %v898 = vadd.f32 0.0, %v897
        %v899 = vpop.f32.mrb[0].mxu0
        %v900 = vadd.f32 0.0, %v899
        %v901 = vpop.f32.mrb[0].mxu0
        %v902 = vadd.f32 0.0, %v901
        %903 = vdwg.mxu0
        %v904 = vpack.c.bf16 %v814, %v810
        %v905 = vpack.c.bf16 %v816, %v812
        %v906 = vpack.c.bf16 %v857, %v853
        %v907 = vpack.c.bf16 %v859, %v855
        %v908 = vpack.c.bf16 %v900, %v896
        %v909 = vpack.c.bf16 %v902, %v898
        %v910 = vsub.f32 1.0, %v475
        %v911 = vmul.f32 %v910, -1e+09
        %v913 = vlaneseq
        %v914 = vshrl.u32 %v913, 7
        %v915 = vsub.s32 0, %v914
        %v916 = vrot.slane %v911, %v915
        %918 = vmatprep.subr.bf16.mxu0 0
        %919 = vmatpush1.bf16.xpose.msra.mxu0 %v906
        %920 = vmatprep.subr.bf16.mxu0 0
        %921 = vmatpush1.bf16.xpose.msra.mxu0 0
        %922 = vmatprep.subr.bf16.mxu0 0
        %923 = vmatpush1.bf16.xpose.msra.mxu0 0
        %924 = vmatprep.subr.bf16.mxu0 0
        %925 = vmatpush1.bf16.xpose.msra.mxu0 0
        %926 = vmatprep.subr.bf16.mxu0 0
        %927 = vmatpush1.bf16.xpose.msra.mxu0 0
        %928 = vmatprep.subr.bf16.mxu0 0
        %929 = vmatpush1.bf16.xpose.msra.mxu0 0
        %930 = vmatprep.subr.bf16.mxu0 0
        %931 = vmatpush1.bf16.xpose.msra.mxu0 0
        %932 = vmatprep.subr.bf16.mxu0 0
        %933 = vmatpush1.bf16.xpose.msra.mxu0 0
        %934 = vmatprep.subr.bf16.mxu0 0
        %935 = vmatpush1.bf16.xpose.msra.mxu0 0
        %936 = vmatprep.subr.bf16.mxu0 0
        %937 = vmatpush1.bf16.xpose.msra.mxu0 0
        %938 = vmatprep.subr.bf16.mxu0 0
        %939 = vmatpush1.bf16.xpose.msra.mxu0 0
        %940 = vmatprep.subr.bf16.mxu0 0
        %941 = vmatpush1.bf16.xpose.msra.mxu0 0
        %942 = vmatprep.subr.bf16.mxu0 0
        %943 = vmatpush1.bf16.xpose.msra.mxu0 0
        %944 = vmatprep.subr.bf16.mxu0 0
        %945 = vmatpush1.bf16.xpose.msra.mxu0 0
        %946 = vmatprep.subr.bf16.mxu0 0
        %947 = vmatpush1.bf16.xpose.msra.mxu0 0
        %948 = vmatprep.subr.bf16.mxu0 0
        %949 = vmatpush1.bf16.xpose.msra.mxu0 0
        %950 = vmatprep.mubr.bf16.mxu0 0
        %951 = vmatmul.mubr.bf16.gmra.mrb[0].mxu0 %v904
        %v952 = vpop.f32.mrb[0].mxu0
        %v953 = vadd.f32 %v916, %v952
        %v954 = vpop.f32.mrb[0].mxu0
        %v955 = vpop.f32.mrb[0].mxu0
        %v956 = vadd.f32 %v916, %v955
        %v957 = vpop.f32.mrb[0].mxu0
        %958 = vdwg.mxu0
        %vm959 = vcmask 130048
        %v960 = vsel %vm959, %v953, -inf
        %961 = vmax.xlane.f32.xlu0 %v960
        %v962 = vpop.xlane.xlu0 %961
        %v963 = vsel %vm959, %v956, -inf
        %964 = vmax.xlane.f32.xlu0 %v963
        %v965 = vpop.xlane.xlu0 %964
        %v966 = vsub.f32 %v953, %v962
        %v967 = vsub.f32 %v956, %v965
        %v968 = vmul.f32 %v966, 1.442695
        %v969 = vpow.pop %v968
        %v970 = vmul.f32 %v967, 1.442695
        %v971 = vpow.pop %v970
        %v972 = vsel %vm959, %v969, 0.0
        %973 = vadd.xlane.f32.xlu0 %v972
        %v974 = vpop.xlane.xlu0 %973
        %v975 = vsel %vm959, %v971, 0.0
        %976 = vadd.xlane.f32.xlu0 %v975
        %v977 = vpop.xlane.xlu0 %976
        %v978 = vrcp.pop %v974
        %v979 = vrcp.pop %v977
        %v980 = vmul.f32 %v969, %v978
        %v981 = vmul.f32 %v971, %v979
        %v982 = vpack.c.bf16 %v981, %v980
        %v984 = vsel %vm959, %v982, 0
        %986 = vmatprep.subr.bf16.mxu0 0
        %987 = vmatpush1.bf16.msra.mxu0 %v908
        %988 = vmatprep.subr.bf16.mxu0 0
        %989 = vmatpush1.bf16.msra.mxu0 0
        %990 = vmatprep.subr.bf16.mxu0 0
        %991 = vmatpush1.bf16.msra.mxu0 0
        %992 = vmatprep.subr.bf16.mxu0 0
        %993 = vmatpush1.bf16.msra.mxu0 0
        %994 = vmatprep.subr.bf16.mxu0 0
        %995 = vmatpush1.bf16.msra.mxu0 0
        %996 = vmatprep.subr.bf16.mxu0 0
        %997 = vmatpush1.bf16.msra.mxu0 0
        %998 = vmatprep.subr.bf16.mxu0 0
        %999 = vmatpush1.bf16.msra.mxu0 0
        %1000 = vmatprep.subr.bf16.mxu0 0
        %1001 = vmatpush1.bf16.msra.mxu0 0
        %1002 = vmatprep.subr.bf16.mxu0 0
        %1003 = vmatpush1.bf16.msra.mxu0 0
        %1004 = vmatprep.subr.bf16.mxu0 0
        %1005 = vmatpush1.bf16.msra.mxu0 0
        %1006 = vmatprep.subr.bf16.mxu0 0
        %1007 = vmatpush1.bf16.msra.mxu0 0
        %1008 = vmatprep.subr.bf16.mxu0 0
        %1009 = vmatpush1.bf16.msra.mxu0 0
        %1010 = vmatprep.subr.bf16.mxu0 0
        %1011 = vmatpush1.bf16.msra.mxu0 0
        %1012 = vmatprep.subr.bf16.mxu0 0
        %1013 = vmatpush1.bf16.msra.mxu0 0
        %1014 = vmatprep.subr.bf16.mxu0 0
        %1015 = vmatpush1.bf16.msra.mxu0 0
        %1016 = vmatprep.subr.bf16.mxu0 0
        %1017 = vmatpush1.bf16.msra.mxu0 0
        %1018 = vmatprep.mubr.bf16.mxu0 0
        %1019 = vmatmul.mubr.bf16.gmra.mrb[0].mxu0 %v984
        %v1020 = vpop.f32.mrb[0].mxu0
        %v1021 = vadd.f32 0.0, %v1020
        %v1022 = vpop.f32.mrb[0].mxu0
        %v1023 = vpop.f32.mrb[0].mxu0
        %v1024 = vadd.f32 0.0, %v1023
        %v1025 = vpop.f32.mrb[0].mxu0
        %1026 = vdwg.mxu0
        %v1027 = vpack.c.bf16 %v1024, %v1021
        %1028 = vst [vmem:[#allocation2] sm:$0xff] %v1027
        %1029 = vmatprep.subr.bf16.mxu0 0
        %1030 = vmatpush1.bf16.xpose.msra.mxu0 %v907
        %1031 = vmatprep.subr.bf16.mxu0 0
        %1032 = vmatpush1.bf16.xpose.msra.mxu0 0
        %1033 = vmatprep.subr.bf16.mxu0 0
        %1034 = vmatpush1.bf16.xpose.msra.mxu0 0
        %1035 = vmatprep.subr.bf16.mxu0 0
        %1036 = vmatpush1.bf16.xpose.msra.mxu0 0
        %1037 = vmatprep.subr.bf16.mxu0 0
        %1038 = vmatpush1.bf16.xpose.msra.mxu0 0
        %1039 = vmatprep.subr.bf16.mxu0 0
        %1040 = vmatpush1.bf16.xpose.msra.mxu0 0
        %1041 = vmatprep.subr.bf16.mxu0 0
        %1042 = vmatpush1.bf16.xpose.msra.mxu0 0
        %1043 = vmatprep.subr.bf16.mxu0 0
        %1044 = vmatpush1.bf16.xpose.msra.mxu0 0
        %1045 = vmatprep.subr.bf16.mxu0 0
        %1046 = vmatpush1.bf16.xpose.msra.mxu0 0
        %1047 = vmatprep.subr.bf16.mxu0 0
        %1048 = vmatpush1.bf16.xpose.msra.mxu0 0
        %1049 = vmatprep.subr.bf16.mxu0 0
        %1050 = vmatpush1.bf16.xpose.msra.mxu0 0
        %1051 = vmatprep.subr.bf16.mxu0 0
        %1052 = vmatpush1.bf16.xpose.msra.mxu0 0
        %1053 = vmatprep.subr.bf16.mxu0 0
        %1054 = vmatpush1.bf16.xpose.msra.mxu0 0
        %1055 = vmatprep.subr.bf16.mxu0 0
        %1056 = vmatpush1.bf16.xpose.msra.mxu0 0
        %1057 = vmatprep.subr.bf16.mxu0 0
        %1058 = vmatpush1.bf16.xpose.msra.mxu0 0
        %1059 = vmatprep.subr.bf16.mxu0 0
        %1060 = vmatpush1.bf16.xpose.msra.mxu0 0
        %1061 = vmatprep.mubr.bf16.mxu0 0
        %1062 = vmatmul.mubr.bf16.gmra.mrb[0].mxu0 %v905
        %v1063 = vpop.f32.mrb[0].mxu0
        %v1064 = vadd.f32 %v916, %v1063
        %v1065 = vpop.f32.mrb[0].mxu0
        %v1066 = vpop.f32.mrb[0].mxu0
        %v1067 = vadd.f32 %v916, %v1066
        %v1068 = vpop.f32.mrb[0].mxu0
        %1069 = vdwg.mxu0
        %v1070 = vsel %vm959, %v1064, -inf
        %1071 = vmax.xlane.f32.xlu0 %v1070
        %v1072 = vpop.xlane.xlu0 %1071
        %v1073 = vsel %vm959, %v1067, -inf
        %1074 = vmax.xlane.f32.xlu0 %v1073
        %v1075 = vpop.xlane.xlu0 %1074
        %v1076 = vsub.f32 %v1064, %v1072
        %v1077 = vsub.f32 %v1067, %v1075
        %v1078 = vmul.f32 %v1076, 1.442695
        %v1079 = vpow.pop %v1078
        %v1080 = vmul.f32 %v1077, 1.442695
        %v1081 = vpow.pop %v1080
        %v1082 = vsel %vm959, %v1079, 0.0
        %1083 = vadd.xlane.f32.xlu0 %v1082
        %v1084 = vpop.xlane.xlu0 %1083
        %v1085 = vsel %vm959, %v1081, 0.0
        %1086 = vadd.xlane.f32.xlu0 %v1085
        %v1087 = vpop.xlane.xlu0 %1086
        %v1088 = vrcp.pop %v1084
        %v1089 = vrcp.pop %v1087
        %v1090 = vmul.f32 %v1079, %v1088
        %v1091 = vmul.f32 %v1081, %v1089
        %v1092 = vpack.c.bf16 %v1091, %v1090
        %v1094 = vsel %vm959, %v1092, 0
        %1096 = vmatprep.subr.bf16.mxu0 0
        %1097 = vmatpush1.bf16.msra.mxu0 %v909
        %1098 = vmatprep.subr.bf16.mxu0 0
        %1099 = vmatpush1.bf16.msra.mxu0 0
        %1100 = vmatprep.subr.bf16.mxu0 0
        %1101 = vmatpush1.bf16.msra.mxu0 0
        %1102 = vmatprep.subr.bf16.mxu0 0
        %1103 = vmatpush1.bf16.msra.mxu0 0
        %1104 = vmatprep.subr.bf16.mxu0 0
        %1105 = vmatpush1.bf16.msra.mxu0 0
        %1106 = vmatprep.subr.bf16.mxu0 0
        %1107 = vmatpush1.bf16.msra.mxu0 0
        %1108 = vmatprep.subr.bf16.mxu0 0
        %1109 = vmatpush1.bf16.msra.mxu0 0
        %1110 = vmatprep.subr.bf16.mxu0 0
        %1111 = vmatpush1.bf16.msra.mxu0 0
        %1112 = vmatprep.subr.bf16.mxu0 0
        %1113 = vmatpush1.bf16.msra.mxu0 0
        %1114 = vmatprep.subr.bf16.mxu0 0
        %1115 = vmatpush1.bf16.msra.mxu0 0
        %1116 = vmatprep.subr.bf16.mxu0 0
        %1117 = vmatpush1.bf16.msra.mxu0 0
        %1118 = vmatprep.subr.bf16.mxu0 0
        %1119 = vmatpush1.bf16.msra.mxu0 0
        %1120 = vmatprep.subr.bf16.mxu0 0
        %1121 = vmatpush1.bf16.msra.mxu0 0
        %1122 = vmatprep.subr.bf16.mxu0 0
        %1123 = vmatpush1.bf16.msra.mxu0 0
        %1124 = vmatprep.subr.bf16.mxu0 0
        %1125 = vmatpush1.bf16.msra.mxu0 0
        %1126 = vmatprep.subr.bf16.mxu0 0
        %1127 = vmatpush1.bf16.msra.mxu0 0
        %1128 = vmatprep.mubr.bf16.mxu0 0
        %1129 = vmatmul.mubr.bf16.gmra.mrb[0].mxu0 %v1094
        %v1130 = vpop.f32.mrb[0].mxu0
        %v1131 = vadd.f32 0.0, %v1130
        %v1132 = vpop.f32.mrb[0].mxu0
        %v1133 = vpop.f32.mrb[0].mxu0
        %v1134 = vadd.f32 0.0, %v1133
        %v1135 = vpop.f32.mrb[0].mxu0
        %1136 = vdwg.mxu0
        %v1137 = vpack.c.bf16 %v1134, %v1131
        %1138 = vst [vmem:[#allocation2 + $0x8] sm:$0xff] %v1137
        %v1139 = vld [vmem:[#allocation2] sm:$0xff]
        %v1140 = vld [vmem:[#allocation2 + $0x8] sm:$0xff]
        %v1141 = vld [vmem:[#allocation5] sm:$0xf]
        %v1142 = vld [vmem:[#allocation5 + $0x4] sm:$0xf]
        %v1143 = vld [vmem:[#allocation5 + $0x8] sm:$0xf]
        %v1144 = vld [vmem:[#allocation5 + $0xc] sm:$0xf]
        %v1145 = vld [vmem:[#allocation5 + $0x10] sm:$0xf]
        %v1146 = vld [vmem:[#allocation5 + $0x14] sm:$0xf]
        %v1147 = vld [vmem:[#allocation5 + $0x18] sm:$0xf]
        %v1148 = vld [vmem:[#allocation5 + $0x1c] sm:$0xf]
        %v1149 = vld [vmem:[#allocation5 + $0x20] sm:$0xf]
        %v1150 = vld [vmem:[#allocation5 + $0x24] sm:$0xf]
        %v1151 = vld [vmem:[#allocation5 + $0x28] sm:$0xf]
        %v1152 = vld [vmem:[#allocation5 + $0x2c] sm:$0xf]
        %v1153 = vld [vmem:[#allocation5 + $0x30] sm:$0xf]
        %v1154 = vld [vmem:[#allocation5 + $0x34] sm:$0xf]
        %v1155 = vld [vmem:[#allocation5 + $0x38] sm:$0xf]
        %v1156 = vld [vmem:[#allocation5 + $0x3c] sm:$0xf]
        %v1157 = vld [vmem:[#allocation5 + $0x40] sm:$0xf]
        %v1158 = vld [vmem:[#allocation5 + $0x44] sm:$0xf]
        %v1159 = vld [vmem:[#allocation5 + $0x48] sm:$0xf]
        %v1160 = vld [vmem:[#allocation5 + $0x4c] sm:$0xf]
        %v1161 = vld [vmem:[#allocation5 + $0x50] sm:$0xf]
        %v1162 = vld [vmem:[#allocation5 + $0x54] sm:$0xf]
        %v1163 = vld [vmem:[#allocation5 + $0x58] sm:$0xf]
        %v1164 = vld [vmem:[#allocation5 + $0x5c] sm:$0xf]
        %v1165 = vld [vmem:[#allocation5 + $0x60] sm:$0xf]
        %v1166 = vld [vmem:[#allocation5 + $0x64] sm:$0xf]
        %v1167 = vld [vmem:[#allocation5 + $0x68] sm:$0xf]
        %v1168 = vld [vmem:[#allocation5 + $0x6c] sm:$0xf]
        %v1169 = vld [vmem:[#allocation5 + $0x70] sm:$0xf]
        %v1170 = vld [vmem:[#allocation5 + $0x74] sm:$0xf]
        %v1171 = vld [vmem:[#allocation5 + $0x78] sm:$0xf]
        %v1172 = vld [vmem:[#allocation5 + $0x7c] sm:$0xf]
        %v1173 = vunpack.c.l.bf16 %v473
        %v1174 = vunpack.c.l.bf16 %v474
        %v1207 = vunpack.c.l.b16 %v1141
        %v1208 = vunpack.c.l.b16 %v1142
        %v1209 = vunpack.c.l.b16 %v1143
        %v1210 = vunpack.c.l.b16 %v1144
        %v1211 = vunpack.c.l.b16 %v1145
        %v1212 = vunpack.c.l.b16 %v1146
        %v1213 = vunpack.c.l.b16 %v1147
        %v1214 = vunpack.c.l.b16 %v1148
        %v1215 = vunpack.c.l.b16 %v1149
        %v1216 = vunpack.c.l.b16 %v1150
        %v1217 = vunpack.c.l.b16 %v1151
        %v1218 = vunpack.c.l.b16 %v1152
        %v1219 = vunpack.c.l.b16 %v1153
        %v1220 = vunpack.c.l.b16 %v1154
        %v1221 = vunpack.c.l.b16 %v1155
        %v1222 = vunpack.c.l.b16 %v1156
        %v1223 = vunpack.c.l.b16 %v1157
        %v1224 = vunpack.c.l.b16 %v1158
        %v1225 = vunpack.c.l.b16 %v1159
        %v1226 = vunpack.c.l.b16 %v1160
        %v1227 = vunpack.c.l.b16 %v1161
        %v1228 = vunpack.c.l.b16 %v1162
        %v1229 = vunpack.c.l.b16 %v1163
        %v1230 = vunpack.c.l.b16 %v1164
        %v1231 = vunpack.c.l.b16 %v1165
        %v1232 = vunpack.c.l.b16 %v1166
        %v1233 = vunpack.c.l.b16 %v1167
        %v1234 = vunpack.c.l.b16 %v1168
        %v1235 = vunpack.c.l.b16 %v1169
        %v1236 = vunpack.c.l.b16 %v1170
        %v1237 = vunpack.c.l.b16 %v1171
        %v1238 = vunpack.c.l.b16 %v1172
        %v1239 = vpack.c.b16 %v1208, %v1207
        %v1240 = vpack.c.b16 %v1210, %v1209
        %v1241 = vpack.c.b16 %v1212, %v1211
        %v1242 = vpack.c.b16 %v1214, %v1213
        %v1243 = vpack.c.b16 %v1216, %v1215
        %v1244 = vpack.c.b16 %v1218, %v1217
        %v1245 = vpack.c.b16 %v1220, %v1219
        %v1246 = vpack.c.b16 %v1222, %v1221
        %v1247 = vpack.c.b16 %v1224, %v1223
        %v1248 = vpack.c.b16 %v1226, %v1225
        %v1249 = vpack.c.b16 %v1228, %v1227
        %v1250 = vpack.c.b16 %v1230, %v1229
        %v1251 = vpack.c.b16 %v1232, %v1231
        %v1252 = vpack.c.b16 %v1234, %v1233
        %v1253 = vpack.c.b16 %v1236, %v1235
        %v1254 = vpack.c.b16 %v1238, %v1237
        %1271 = vmatprep.subr.bf16.mxu0 0
        %1272 = vmatpush1.bf16.msra.mxu0 %v1239
        %1273 = vmatprep.subr.bf16.mxu0 0
        %1274 = vmatpush1.bf16.msra.mxu0 %v1240
        %1275 = vmatprep.subr.bf16.mxu0 0
        %1276 = vmatpush1.bf16.msra.mxu0 %v1241
        %1277 = vmatprep.subr.bf16.mxu0 0
        %1278 = vmatpush1.bf16.msra.mxu0 %v1242
        %1279 = vmatprep.subr.bf16.mxu0 0
        %1280 = vmatpush1.bf16.msra.mxu0 %v1243
        %1281 = vmatprep.subr.bf16.mxu0 0
        %1282 = vmatpush1.bf16.msra.mxu0 %v1244
        %1283 = vmatprep.subr.bf16.mxu0 0
        %1284 = vmatpush1.bf16.msra.mxu0 %v1245
        %1285 = vmatprep.subr.bf16.mxu0 0
        %1286 = vmatpush1.bf16.msra.mxu0 %v1246
        %1287 = vmatprep.subr.bf16.mxu0 0
        %1288 = vmatpush1.bf16.msra.mxu0 %v1247
        %1289 = vmatprep.subr.bf16.mxu0 0
        %1290 = vmatpush1.bf16.msra.mxu0 %v1248
        %1291 = vmatprep.subr.bf16.mxu0 0
        %1292 = vmatpush1.bf16.msra.mxu0 %v1249
        %1293 = vmatprep.subr.bf16.mxu0 0
        %1294 = vmatpush1.bf16.msra.mxu0 %v1250
        %1295 = vmatprep.subr.bf16.mxu0 0
        %1296 = vmatpush1.bf16.msra.mxu0 %v1251
        %1297 = vmatprep.subr.bf16.mxu0 0
        %1298 = vmatpush1.bf16.msra.mxu0 %v1252
        %1299 = vmatprep.subr.bf16.mxu0 0
        %1300 = vmatpush1.bf16.msra.mxu0 %v1253
        %1301 = vmatprep.subr.bf16.mxu0 0
        %1302 = vmatpush1.bf16.msra.mxu0 %v1254
        %1303 = vmatprep.mubr.bf16.mxu0 %v1140
        %1304 = vmatmul.mubr.bf16.gmra.mrb[0].mxu0 %v1139
        %v1305 = vpop.f32.mrb[0].mxu0
        %v1306 = vadd.f32 %v1173, %v1305
        %v1307 = vpop.f32.mrb[0].mxu0
        %v1308 = vpop.f32.mrb[0].mxu0
        %v1309 = vadd.f32 %v1174, %v1308
        %v1310 = vpop.f32.mrb[0].mxu0
        %1311 = vdwg.mxu0
        %v1312 = vld [vmem:[%s4] sm:$0x1]
        %v1313 = vld [vmem:[%s5] sm:$0x1]
        %v1314 = vmul.f32 %v1306, %v480
        %v1315 = vmul.f32 %v1309, %v480
        %1316 = vadd.xlane.f32.xlu0 %v1314
        %v1317 = vpop.xlane.xlu0 %1316
        %1318 = vadd.xlane.f32.xlu0 %v1315
        %v1319 = vpop.xlane.xlu0 %1318
        %v1320 = vmul.f32 %v1317, 0.03125
        %v1321 = vmul.f32 %v1319, 0.03125
        %v1322 = vsub.f32 %v1306, %v1320
        %v1323 = vsub.f32 %v1309, %v1321
        %v1324 = vmul.f32 %v1322, %v480
        %v1325 = vmul.f32 %v1323, %v480
        %v1326 = vmul.f32 %v1324, %v1324
        %v1327 = vmul.f32 %v1325, %v1325
        %1328 = vadd.xlane.f32.xlu0 %v1326
        %v1329 = vpop.xlane.xlu0 %1328
        %1330 = vadd.xlane.f32.xlu0 %v1327
        %v1331 = vpop.xlane.xlu0 %1330
        %v1332 = vmul.f32 %v1329, 0.032258064
        %v1333 = vmul.f32 %v1331, 0.032258064
        %v1334 = vrsqrt.pop %v1332
        %v1335 = vmul.f32 %v1332, %v1334
        %vm1336 = vcmp.eq.f32.partialorder %v1332, inf
        %v1337 = vsel %vm1336, %v1332, %v1335
        %vm1338 = vcmp.eq.f32.partialorder %v1332, 0.0
        %v1339 = vand.u32 %v1332, 2147483648
        %v1340 = vsel %vm1338, %v1339, %v1337
        %v1341 = vrsqrt.pop %v1333
        %v1342 = vmul.f32 %v1333, %v1341
        %vm1343 = vcmp.eq.f32.partialorder %v1333, inf
        %v1344 = vsel %vm1343, %v1333, %v1342
        %vm1345 = vcmp.eq.f32.partialorder %v1333, 0.0
        %v1346 = vand.u32 %v1333, 2147483648
        %v1347 = vsel %vm1345, %v1346, %v1344
        %v1348 = vadd.f32 %v1340, 0.001
        %v1349 = vadd.f32 %v1347, 0.001
        %v1350 = vrcp.pop %v1348
        %v1351 = vmul.f32 1.0, %v1350
        %v1352 = vrcp.pop %v1349
        %v1353 = vmul.f32 1.0, %v1352
        %v1354 = vmul.f32 %v1322, %v1351
        %v1355 = vmul.f32 %v1323, %v1353
        %v1357 = vlaneseq
        %v1358 = vshrl.u32 %v1357, 7
        %v1359 = vsub.s32 0, %v1358
        %v1360 = vrot.slane %v1312, %v1359
        %v1362 = vmul.f32 %v1354, %v1360
        %v1363 = vmul.f32 %v1355, %v1360
        %v1365 = vlaneseq
        %v1366 = vshrl.u32 %v1365, 7
        %v1367 = vsub.s32 0, %v1366
        %v1368 = vrot.slane %v1313, %v1367
        %v1370 = vadd.f32 %v1362, %v1368
        %v1371 = vadd.f32 %v1363, %v1368
        %v1372 = vpack.c.bf16 %v1371, %v1370
        %v1373 = vld [vmem:[%s6] sm:$0xf]
        %v1374 = vld [vmem:[%s6 + $0x4] sm:$0xf]
        %v1375 = vld [vmem:[%s6 + $0x8] sm:$0xf]
        %v1376 = vld [vmem:[%s6 + $0xc] sm:$0xf]
        %v1377 = vld [vmem:[%s6 + $0x10] sm:$0xf]
        %v1378 = vld [vmem:[%s6 + $0x14] sm:$0xf]
        %v1379 = vld [vmem:[%s6 + $0x18] sm:$0xf]
        %v1380 = vld [vmem:[%s6 + $0x1c] sm:$0xf]
        %v1381 = vld [vmem:[%s6 + $0x20] sm:$0xf]
        %v1382 = vld [vmem:[%s6 + $0x24] sm:$0xf]
        %v1383 = vld [vmem:[%s6 + $0x28] sm:$0xf]
        %v1384 = vld [vmem:[%s6 + $0x2c] sm:$0xf]
        %v1385 = vld [vmem:[%s6 + $0x30] sm:$0xf]
        %v1386 = vld [vmem:[%s6 + $0x34] sm:$0xf]
        %v1387 = vld [vmem:[%s6 + $0x38] sm:$0xf]
        %v1388 = vld [vmem:[%s6 + $0x3c] sm:$0xf]
        %v1389 = vld [vmem:[%s7] sm:$0x1]
        %v1391 = vlaneseq
        %v1392 = vshrl.u32 %v1391, 7
        %v1393 = vsub.s32 0, %v1392
        %v1394 = vrot.slane %v1389, %v1393
        %v1412 = vunpack.c.l.b16 %v1373
        %v1413 = vunpack.c.l.b16 %v1374
        %v1414 = vunpack.c.l.b16 %v1375
        %v1415 = vunpack.c.l.b16 %v1376
        %v1416 = vunpack.c.l.b16 %v1377
        %v1417 = vunpack.c.l.b16 %v1378
        %v1418 = vunpack.c.l.b16 %v1379
        %v1419 = vunpack.c.l.b16 %v1380
        %v1420 = vunpack.c.l.b16 %v1381
        %v1421 = vunpack.c.l.b16 %v1382
        %v1422 = vunpack.c.l.b16 %v1383
        %v1423 = vunpack.c.l.b16 %v1384
        %v1424 = vunpack.c.l.b16 %v1385
        %v1425 = vunpack.c.l.b16 %v1386
        %v1426 = vunpack.c.l.b16 %v1387
        %v1427 = vunpack.c.l.b16 %v1388
        %v1428 = vpack.c.b16 %v1413, %v1412
        %v1429 = vpack.c.b16 %v1415, %v1414
        %v1430 = vpack.c.b16 %v1417, %v1416
        %v1431 = vpack.c.b16 %v1419, %v1418
        %v1432 = vpack.c.b16 %v1421, %v1420
        %v1433 = vpack.c.b16 %v1423, %v1422
        %v1434 = vpack.c.b16 %v1425, %v1424
        %v1435 = vpack.c.b16 %v1427, %v1426
        %1444 = vmatprep.subr.bf16.mxu0 0
        %1445 = vmatpush1.bf16.msra.mxu0 %v1428
        %1446 = vmatprep.subr.bf16.mxu0 0
        %1447 = vmatpush1.bf16.msra.mxu0 %v1429
        %1448 = vmatprep.subr.bf16.mxu0 0
        %1449 = vmatpush1.bf16.msra.mxu0 %v1430
        %1450 = vmatprep.subr.bf16.mxu0 0
        %1451 = vmatpush1.bf16.msra.mxu0 %v1431
        %1452 = vmatprep.subr.bf16.mxu0 0
        %1453 = vmatpush1.bf16.msra.mxu0 %v1432
        %1454 = vmatprep.subr.bf16.mxu0 0
        %1455 = vmatpush1.bf16.msra.mxu0 %v1433
        %1456 = vmatprep.subr.bf16.mxu0 0
        %1457 = vmatpush1.bf16.msra.mxu0 %v1434
        %1458 = vmatprep.subr.bf16.mxu0 0
        %1459 = vmatpush1.bf16.msra.mxu0 %v1435
        %1460 = vmatprep.subr.bf16.mxu0 0
        %1461 = vmatpush1.bf16.msra.mxu0 0
        %1462 = vmatprep.subr.bf16.mxu0 0
        %1463 = vmatpush1.bf16.msra.mxu0 0
        %1464 = vmatprep.subr.bf16.mxu0 0
        %1465 = vmatpush1.bf16.msra.mxu0 0
        %1466 = vmatprep.subr.bf16.mxu0 0
        %1467 = vmatpush1.bf16.msra.mxu0 0
        %1468 = vmatprep.subr.bf16.mxu0 0
        %1469 = vmatpush1.bf16.msra.mxu0 0
        %1470 = vmatprep.subr.bf16.mxu0 0
        %1471 = vmatpush1.bf16.msra.mxu0 0
        %1472 = vmatprep.subr.bf16.mxu0 0
        %1473 = vmatpush1.bf16.msra.mxu0 0
        %1474 = vmatprep.subr.bf16.mxu0 0
        %1475 = vmatpush1.bf16.msra.mxu0 0
        %1476 = vmatprep.mubr.bf16.mxu0 0
        %1477 = vmatmul.mubr.bf16.gmra.mrb[0].mxu0 %v1372
        %v1478 = vpop.f32.mrb[0].mxu0
        %v1479 = vadd.f32 %v1394, %v1478
        %v1480 = vpop.f32.mrb[0].mxu0
        %v1481 = vpop.f32.mrb[0].mxu0
        %v1482 = vadd.f32 %v1394, %v1481
        %v1483 = vpop.f32.mrb[0].mxu0
        %1484 = vdwg.mxu0
        %v1485 = vmax.f32 %v1479, 0.0
        %v1486 = vmax.f32 %v1482, 0.0
        %v1487 = vpack.c.bf16 %v1486, %v1485
        %v1488 = vld [vmem:[#allocation7] sm:$0xf]
        %v1489 = vld [vmem:[#allocation7 + $0x4] sm:$0xf]
        %v1490 = vld [vmem:[#allocation7 + $0x8] sm:$0xf]
        %v1491 = vld [vmem:[#allocation7 + $0xc] sm:$0xf]
        %v1492 = vld [vmem:[#allocation7 + $0x10] sm:$0xf]
        %v1493 = vld [vmem:[#allocation7 + $0x14] sm:$0xf]
        %v1494 = vld [vmem:[#allocation7 + $0x18] sm:$0xf]
        %v1495 = vld [vmem:[#allocation7 + $0x1c] sm:$0xf]
        %v1496 = vld [vmem:[#allocation7 + $0x20] sm:$0xf]
        %v1497 = vld [vmem:[#allocation7 + $0x24] sm:$0xf]
        %v1498 = vld [vmem:[#allocation7 + $0x28] sm:$0xf]
        %v1499 = vld [vmem:[#allocation7 + $0x2c] sm:$0xf]
        %v1500 = vld [vmem:[#allocation7 + $0x30] sm:$0xf]
        %v1501 = vld [vmem:[#allocation7 + $0x34] sm:$0xf]
        %v1502 = vld [vmem:[#allocation7 + $0x38] sm:$0xf]
        %v1503 = vld [vmem:[#allocation7 + $0x3c] sm:$0xf]
        %v1504 = vld [vmem:[%s9] sm:$0x1]
        %v1506 = vlaneseq
        %v1507 = vshrl.u32 %v1506, 7
        %v1508 = vsub.s32 0, %v1507
        %v1509 = vrot.slane %v1504, %v1508
        %v1527 = vunpack.c.l.b16 %v1488
        %v1528 = vunpack.c.l.b16 %v1489
        %v1529 = vunpack.c.l.b16 %v1490
        %v1530 = vunpack.c.l.b16 %v1491
        %v1531 = vunpack.c.l.b16 %v1492
        %v1532 = vunpack.c.l.b16 %v1493
        %v1533 = vunpack.c.l.b16 %v1494
        %v1534 = vunpack.c.l.b16 %v1495
        %v1535 = vunpack.c.l.b16 %v1496
        %v1536 = vunpack.c.l.b16 %v1497
        %v1537 = vunpack.c.l.b16 %v1498
        %v1538 = vunpack.c.l.b16 %v1499
        %v1539 = vunpack.c.l.b16 %v1500
        %v1540 = vunpack.c.l.b16 %v1501
        %v1541 = vunpack.c.l.b16 %v1502
        %v1542 = vunpack.c.l.b16 %v1503
        %v1543 = vpack.c.b16 %v1528, %v1527
        %v1544 = vpack.c.b16 %v1530, %v1529
        %v1545 = vpack.c.b16 %v1532, %v1531
        %v1546 = vpack.c.b16 %v1534, %v1533
        %v1547 = vpack.c.b16 %v1536, %v1535
        %v1548 = vpack.c.b16 %v1538, %v1537
        %v1549 = vpack.c.b16 %v1540, %v1539
        %v1550 = vpack.c.b16 %v1542, %v1541
        %1559 = vmatprep.subr.bf16.mxu0 0
        %1560 = vmatpush1.bf16.msra.mxu0 %v1543
        %1561 = vmatprep.subr.bf16.mxu0 0
        %1562 = vmatpush1.bf16.msra.mxu0 %v1544
        %1563 = vmatprep.subr.bf16.mxu0 0
        %1564 = vmatpush1.bf16.msra.mxu0 %v1545
        %1565 = vmatprep.subr.bf16.mxu0 0
        %1566 = vmatpush1.bf16.msra.mxu0 %v1546
        %1567 = vmatprep.subr.bf16.mxu0 0
        %1568 = vmatpush1.bf16.msra.mxu0 %v1547
        %1569 = vmatprep.subr.bf16.mxu0 0
        %1570 = vmatpush1.bf16.msra.mxu0 %v1548
        %1571 = vmatprep.subr.bf16.mxu0 0
        %1572 = vmatpush1.bf16.msra.mxu0 %v1549
        %1573 = vmatprep.subr.bf16.mxu0 0
        %1574 = vmatpush1.bf16.msra.mxu0 %v1550
        %1575 = vmatprep.subr.bf16.mxu0 0
        %1576 = vmatpush1.bf16.msra.mxu0 0
        %1577 = vmatprep.subr.bf16.mxu0 0
        %1578 = vmatpush1.bf16.msra.mxu0 0
        %1579 = vmatprep.subr.bf16.mxu0 0
        %1580 = vmatpush1.bf16.msra.mxu0 0
        %1581 = vmatprep.subr.bf16.mxu0 0
        %1582 = vmatpush1.bf16.msra.mxu0 0
        %1583 = vmatprep.subr.bf16.mxu0 0
        %1584 = vmatpush1.bf16.msra.mxu0 0
        %1585 = vmatprep.subr.bf16.mxu0 0
        %1586 = vmatpush1.bf16.msra.mxu0 0
        %1587 = vmatprep.subr.bf16.mxu0 0
        %1588 = vmatpush1.bf16.msra.mxu0 0
        %1589 = vmatprep.subr.bf16.mxu0 0
        %1590 = vmatpush1.bf16.msra.mxu0 0
        %1591 = vmatprep.mubr.bf16.mxu0 0
        %1592 = vmatmul.mubr.bf16.gmra.mrb[0].mxu0 %v1487
        %v1593 = vpop.f32.mrb[0].mxu0
        %v1594 = vadd.f32 %v1509, %v1593
        %v1595 = vpop.f32.mrb[0].mxu0
        %v1596 = vpop.f32.mrb[0].mxu0
        %v1597 = vadd.f32 %v1509, %v1596
        %v1598 = vpop.f32.mrb[0].mxu0
        %1599 = vdwg.mxu0
        %v1600 = vadd.f32 %v1594, %v1370
        %v1601 = vadd.f32 %v1597, %v1371
        %v1602 = vld [vmem:[%s10] sm:$0x1]
        %v1603 = vld [vmem:[%s11] sm:$0x1]
        %v1604 = vmul.f32 %v1600, %v480
        %v1605 = vmul.f32 %v1601, %v480
        %1606 = vadd.xlane.f32.xlu0 %v1604
        %v1607 = vpop.xlane.xlu0 %1606
        %1608 = vadd.xlane.f32.xlu0 %v1605
        %v1609 = vpop.xlane.xlu0 %1608
        %v1610 = vmul.f32 %v1607, 0.03125
        %v1611 = vmul.f32 %v1609, 0.03125
        %v1612 = vsub.f32 %v1600, %v1610
        %v1613 = vsub.f32 %v1601, %v1611
        %v1614 = vmul.f32 %v1612, %v480
        %v1615 = vmul.f32 %v1613, %v480
        %v1616 = vmul.f32 %v1614, %v1614
        %v1617 = vmul.f32 %v1615, %v1615
        %1618 = vadd.xlane.f32.xlu0 %v1616
        %v1619 = vpop.xlane.xlu0 %1618
        %1620 = vadd.xlane.f32.xlu0 %v1617
        %v1621 = vpop.xlane.xlu0 %1620
        %v1622 = vmul.f32 %v1619, 0.032258064
        %v1623 = vmul.f32 %v1621, 0.032258064
        %v1624 = vrsqrt.pop %v1622
        %v1625 = vmul.f32 %v1622, %v1624
        %vm1626 = vcmp.eq.f32.partialorder %v1622, inf
        %v1627 = vsel %vm1626, %v1622, %v1625
        %vm1628 = vcmp.eq.f32.partialorder %v1622, 0.0
        %v1629 = vand.u32 %v1622, 2147483648
        %v1630 = vsel %vm1628, %v1629, %v1627
        %v1631 = vrsqrt.pop %v1623
        %v1632 = vmul.f32 %v1623, %v1631
        %vm1633 = vcmp.eq.f32.partialorder %v1623, inf
        %v1634 = vsel %vm1633, %v1623, %v1632
        %vm1635 = vcmp.eq.f32.partialorder %v1623, 0.0
        %v1636 = vand.u32 %v1623, 2147483648
        %v1637 = vsel %vm1635, %v1636, %v1634
        %v1638 = vadd.f32 %v1630, 0.001
        %v1639 = vadd.f32 %v1637, 0.001
        %v1640 = vrcp.pop %v1638
        %v1641 = vmul.f32 1.0, %v1640
        %v1642 = vrcp.pop %v1639
        %v1643 = vmul.f32 1.0, %v1642
        %v1644 = vmul.f32 %v1612, %v1641
        %v1645 = vmul.f32 %v1613, %v1643
        %v1647 = vlaneseq
        %v1648 = vshrl.u32 %v1647, 7
        %v1649 = vsub.s32 0, %v1648
        %v1650 = vrot.slane %v1602, %v1649
        %v1652 = vmul.f32 %v1644, %v1650
        %v1653 = vmul.f32 %v1645, %v1650
        %v1655 = vlaneseq
        %v1656 = vshrl.u32 %v1655, 7
        %v1657 = vsub.s32 0, %v1656
        %v1658 = vrot.slane %v1603, %v1657
        %v1660 = vadd.f32 %v1652, %v1658
        %v1661 = vadd.f32 %v1653, %v1658
        %v1662 = vpack.c.bf16 %v1661, %v1660
        %v1664 = vunpack.c.l.b16 %v1662
        %v1665 = vunpack.c.h.b16 %v1662
        %v1666 = vpack.c.b16 %v1664, %v1664
        %v1667 = vpack.c.b16 %v1665, %v1665
        %1670 = vst [vmem:[%s471] sm:$0xf] %v1666
        %1671 = vst [vmem:[%s471 + $0x4] sm:$0xf] %v1667
        %p1672 = scmp.lt.s32.totalorder %s25, 1
        %s1673 = scalar_select %p1672, %s25, 1
        %s1674 = smul.addr %s1673, 2
        %s1675 = smul.addr %s1674, 4
        %s1676 = scalar_lea.vmem %s12, %s1675
        // Predicated region
        $region81: #{encoder_forward.1} parent=67 // pred_check
          %p1677 = pneg %p305
        $region82: #{encoder_forward.1} parent=67 // pred_check_branch
          %1679 = sbr.rel (%p1677) target = $region84
        $region83: #{encoder_forward.1} parent=67 // pred_region
          _
        $region84: #{encoder_forward.1} parent=67 // pred_fallthru
          _
      $region68: #{encoder_forward.1} parent=5 // pred_fallthru
        _
      %p1680 = scmp.le.s32.totalorder 2, %s20
      // Predicated region
      $region85: #{encoder_forward.1} parent=5 // pred_check
        %p1681 = pneg %p1680
      $region86: #{encoder_forward.1} parent=5 // pred_check_branch
        %1683 = sbr.rel (%p1681) target = $region88
      $region87: #{encoder_forward.1} parent=5 // pred_region
        %s1684 = ssub.s32 %s20, 2
        // Predicated region
        $region89: #{encoder_forward.1} parent=87 // pred_check
          %p1685 = pneg %p311
        $region90: #{encoder_forward.1} parent=87 // pred_check_branch
          %1687 = sbr.rel (%p1685) target = $region92
        $region91: #{encoder_forward.1} parent=87 // pred_region
          %p1688 = scmp.lt.s32.totalorder %s26, 1
          %s1689 = scalar_select %p1688, %s26, 1
          %s1690 = smul.addr %s1689, 2
          %s1691 = smul.addr %s1690, 4
          %s1692 = scalar_lea.vmem %s12, %s1691
        $region92: #{encoder_forward.1} parent=87 // pred_fallthru
          _
      $region88: #{encoder_forward.1} parent=5 // pred_fallthru
        _
    $region6: #{encoder_forward.1} parent=1 // loop_footer
      %s24 = sadd.s32 1, %s20
    $region7: #{encoder_forward.1} parent=1 // loop_footer_branch
      %19 = sbr.rel target = $region3
    $region8: #{encoder_forward.1} parent=1 // loop_exit
      _
    %1693 = vsyncpa [#allocation4], 1
    %s1694 = scalar_lea.sflag [#allocation4], 1
    %1695 = vsyncpa %s1694, 1
    %1696 = vsyncpa [#allocation6], 1

</llo_original>
